<compile_context>
chip_gen: v5e
topology: v5e:2x2
jax: 0.10.0
libtpu: 0.0.40
codegen_flags: <defaults>
</compile_context>

<pallas_src>
import jax
import jax.numpy as jnp
from jax import lax
from jax.experimental import pallas as pl
from jax.experimental.pallas import tpu as pltpu


def gru_recurrence_kernel(gi_ref, whh_ref, bhn_ref, ann_ref):
    """Serial GRU recurrence over a fully VMEM-resident sequence.

    gi_ref  : (S, B, 3H)  precomputed x @ W_ih^T + b_ih + [b_hr, b_hz, 0]
    whh_ref : (H, 3H)     recurrent weight, pre-transposed (h @ W -> gates)
    bhn_ref : (1, H)      b_hn (must stay inside the r * (...) term)
    ann_ref : (S, B, H)   output: hidden state at every step
    """
    S, B, H = ann_ref.shape

    # Hoist loads / broadcasts out of the serial loop.
    whh = whh_ref[...]                                   # (H, 3H), stays resident
    bhn = jnp.broadcast_to(bhn_ref[...], (B, H))         # (B, H), broadcast once

    def step(t, h):
        gi = gi_ref[t]                                   # (B, 3H) hoisted input proj
        # Only the recurrent matmul remains on the serial critical path.
        gh = jnp.dot(h, whh, preferred_element_type=jnp.float32)   # (B, 3H)

        # PyTorch GRUCell gate order along 3H: (r, z, n).
        r = jax.nn.sigmoid(gi[:, :H] + gh[:, :H])
        z = jax.nn.sigmoid(gi[:, H:2 * H] + gh[:, H:2 * H])
        n = jnp.tanh(gi[:, 2 * H:] + r * (gh[:, 2 * H:] + bhn))
        h_new = (1.0 - z) * n + z * h

        ann_ref[t] = h_new.astype(ann_ref.dtype)
        return h_new                                     # vreg-resident carry

    h0 = jnp.zeros((B, H), jnp.float32)
    lax.fori_loop(0, S, step, h0, unroll=True)


def gru_encoder_forward(inputs, emb_table, w_ih, w_hh, b_ih, b_hh):
    """inputs: (B, S) int32 token ids. Returns (annotations (B,S,H), hidden (B,H))."""
    B, S = inputs.shape
    H = emb_table.shape[1]

    # ---- XLA glue: embedding gather + hoisted input projection (one big matmul).
    encoded = jnp.take(emb_table, inputs, axis=0)             # (B, S, H)
    encoded_tm = jnp.transpose(encoded, (1, 0, 2))            # (S, B, H) time-major

    wih_t = jnp.transpose(w_ih)                               # (H, 3H)
    whh_t = jnp.transpose(w_hh)                               # (H, 3H)

    # Fold b_ih fully and the r/z slices of b_hh into the input projection.
    bias_gi = b_ih + jnp.concatenate(
        [b_hh[:2 * H], jnp.zeros((H,), b_hh.dtype)])          # (3H,)
    gi_tm = (encoded_tm.reshape(S * B, H) @ wih_t).reshape(S, B, 3 * H) + bias_gi
    bhn = b_hh[2 * H:].reshape(1, H)                          # (1, H)

    # ---- Pallas kernel: single grid point, whole sequence resident in VMEM.
    ann_tm = pl.pallas_call(
        gru_recurrence_kernel,
        out_shape=jax.ShapeDtypeStruct((S, B, H), jnp.float32),
        grid_spec=pltpu.PrefetchScalarGridSpec(
            num_scalar_prefetch=0,
            grid=(1,),
            in_specs=[
                pl.BlockSpec((S, B, 3 * H), lambda i: (0, 0, 0)),   # gi (all steps)
                pl.BlockSpec((H, 3 * H), lambda i: (0, 0)),          # W_hh^T
                pl.BlockSpec((1, H), lambda i: (0, 0)),              # b_hn
            ],
            out_specs=pl.BlockSpec((S, B, H), lambda i: (0, 0, 0)),  # annotations
        ),
        compiler_params=pltpu.CompilerParams(
            dimension_semantics=("arbitrary",)),                     # sequential recurrence
    )(gi_tm, whh_t, bhn)

    annotations = jnp.transpose(ann_tm, (1, 0, 2))            # (B, S, H)
    hidden = ann_tm[-1]                                        # (B, H) final state
    return annotations, hidden


def gru_encoder_reference(inputs, emb_table, w_ih, w_hh, b_ih, b_hh):
    """Pure-JAX reference matching torch.nn.GRUCell semantics."""
    B, S = inputs.shape
    H = emb_table.shape[1]
    encoded = jnp.take(emb_table, inputs, axis=0)

    def step(h, x):
        gi = x @ w_ih.T + b_ih
        gh = h @ w_hh.T + b_hh
        i_r, i_z, i_n = gi[:, :H], gi[:, H:2 * H], gi[:, 2 * H:]
        h_r, h_z, h_n = gh[:, :H], gh[:, H:2 * H], gh[:, 2 * H:]
        r = jax.nn.sigmoid(i_r + h_r)
        z = jax.nn.sigmoid(i_z + h_z)
        n = jnp.tanh(i_n + r * h_n)
        h_new = (1.0 - z) * n + z * h
        return h_new, h_new

    h0 = jnp.zeros((B, H), jnp.float32)
    h_final, anns = jax.lax.scan(step, h0, jnp.transpose(encoded, (1, 0, 2)))
    return jnp.transpose(anns, (1, 0, 2)), h_final


if __name__ == "__main__":
    VOCAB = 50
    HIDDEN = 128
    BATCH = 8
    SEQ = 8

    key = jax.random.PRNGKey(0)
    k_emb, k_wih, k_whh, k_bih, k_bhh, k_in = jax.random.split(key, 6)

    # Deterministic init mirroring nn.Embedding (N(0,1)) and nn.GRUCell
    # (uniform(-1/sqrt(H), 1/sqrt(H))) parameter shapes.
    bound = 1.0 / jnp.sqrt(jnp.float32(HIDDEN))
    emb_table = jax.random.normal(k_emb, (VOCAB, HIDDEN), jnp.float32)
    w_ih = jax.random.uniform(k_wih, (3 * HIDDEN, HIDDEN), jnp.float32, -bound, bound)
    w_hh = jax.random.uniform(k_whh, (3 * HIDDEN, HIDDEN), jnp.float32, -bound, bound)
    b_ih = jax.random.uniform(k_bih, (3 * HIDDEN,), jnp.float32, -bound, bound)
    b_hh = jax.random.uniform(k_bhh, (3 * HIDDEN,), jnp.float32, -bound, bound)

    inputs = jax.random.randint(k_in, (BATCH, SEQ), 0, VOCAB, dtype=jnp.int32)

    annotations, hidden = gru_encoder_forward(inputs, emb_table, w_ih, w_hh, b_ih, b_hh)
    jax.block_until_ready((annotations, hidden))

    ann_ref, hid_ref = gru_encoder_reference(inputs, emb_table, w_ih, w_hh, b_ih, b_hh)
    assert annotations.shape == (BATCH, SEQ, HIDDEN)
    assert hidden.shape == (BATCH, HIDDEN)
    assert jnp.allclose(annotations, ann_ref, atol=1e-5, rtol=1e-5)
    assert jnp.allclose(hidden, hid_ref, atol=1e-5, rtol=1e-5)

    print("KERNEL_OK")
</pallas_src>

<mosaic_0001>
module attributes {stable_mosaic.version = 11 : i64} {
  func.func @gru_recurrence_kernel(%arg0: i32, %arg1: memref<8x8x384xf32, #tpu.memory_space<vmem>>, %arg2: memref<128x384xf32, #tpu.memory_space<vmem>>, %arg3: memref<1x128xf32, #tpu.memory_space<vmem>>, %arg4: memref<8x8x128xf32, #tpu.memory_space<vmem>>) attributes {dimension_semantics = [#tpu.dimension_semantics<arbitrary>], iteration_bounds = array<i64: 1>, scalar_prefetch = 0 : i64, scratch_operands = 0 : i64, tpu.core_type = #tpu.core_type<tc>, window_params = [{pipeline_mode = #tpu.pipeline_mode<synchronous>, transform_indices = @transform_0, window_bounds = array<i64: 8, 8, 384>}, {pipeline_mode = #tpu.pipeline_mode<synchronous>, transform_indices = @transform_1, window_bounds = array<i64: 128, 384>}, {pipeline_mode = #tpu.pipeline_mode<synchronous>, transform_indices = @transform_2, window_bounds = array<i64: 1, 128>}, {pipeline_mode = #tpu.pipeline_mode<synchronous>, transform_indices = @transform_3, window_bounds = array<i64: 8, 8, 128>}]} {
    %c0 = arith.constant 0 : index
    %c0_0 = arith.constant 0 : index
    %0 = vector.load %arg2[%c0, %c0_0] : memref<128x384xf32, #tpu.memory_space<vmem>>, vector<128x384xf32>
    %c0_1 = arith.constant 0 : index
    %c0_2 = arith.constant 0 : index
    %1 = vector.load %arg3[%c0_1, %c0_2] : memref<1x128xf32, #tpu.memory_space<vmem>>, vector<1x128xf32>
    %2 = vector.shape_cast %1 : vector<1x128xf32> to vector<1x128xf32>
    %3 = vector.broadcast %2 : vector<1x128xf32> to vector<8x128xf32>
    %cst = arith.constant 0.000000e+00 : f32
    %4 = vector.broadcast %cst : f32 to vector<8x128xf32>
    %c0_i32 = arith.constant 0 : i32
    %5 = arith.index_cast %c0_i32 : i32 to index
    %c0_3 = arith.constant 0 : index
    %c0_4 = arith.constant 0 : index
    %6 = vector.load %arg1[%5, %c0_3, %c0_4] : memref<8x8x384xf32, #tpu.memory_space<vmem>>, vector<1x8x384xf32>
    %7 = vector.shape_cast %6 : vector<1x8x384xf32> to vector<8x384xf32>
    %cst_5 = arith.constant dense<0.000000e+00> : vector<8x384xf32>
    %8 = tpu.matmul %4, %0, %cst_5 {dimension_numbers = #tpu.dot_dimension_numbers<[1], [0], [0], [1], [0, 0, 1, 1], [], []>} : vector<8x128xf32>, vector<128x384xf32>, vector<8x384xf32> -> vector<8x384xf32>
    %9 = vector.extract_strided_slice %7 {offsets = [0, 0], sizes = [8, 128], strides = [1, 1]} : vector<8x384xf32> to vector<8x128xf32>
    %10 = vector.extract_strided_slice %8 {offsets = [0, 0], sizes = [8, 128], strides = [1, 1]} : vector<8x384xf32> to vector<8x128xf32>
    %11 = arith.addf %9, %10 : vector<8x128xf32>
    %12 = arith.negf %11 : vector<8x128xf32>
    %13 = math.exp %12 : vector<8x128xf32>
    %cst_6 = arith.constant 1.000000e+00 : f32
    %14 = vector.broadcast %cst_6 : f32 to vector<8x128xf32>
    %15 = arith.addf %14, %13 : vector<8x128xf32>
    %16 = arith.divf %14, %15 : vector<8x128xf32>
    %17 = vector.extract_strided_slice %7 {offsets = [0, 128], sizes = [8, 128], strides = [1, 1]} : vector<8x384xf32> to vector<8x128xf32>
    %18 = vector.extract_strided_slice %8 {offsets = [0, 128], sizes = [8, 128], strides = [1, 1]} : vector<8x384xf32> to vector<8x128xf32>
    %19 = arith.addf %17, %18 : vector<8x128xf32>
    %20 = arith.negf %19 : vector<8x128xf32>
    %21 = math.exp %20 : vector<8x128xf32>
    %cst_7 = arith.constant 1.000000e+00 : f32
    %22 = vector.broadcast %cst_7 : f32 to vector<8x128xf32>
    %23 = arith.addf %22, %21 : vector<8x128xf32>
    %24 = arith.divf %22, %23 : vector<8x128xf32>
    %25 = vector.extract_strided_slice %7 {offsets = [0, 256], sizes = [8, 128], strides = [1, 1]} : vector<8x384xf32> to vector<8x128xf32>
    %26 = vector.extract_strided_slice %8 {offsets = [0, 256], sizes = [8, 128], strides = [1, 1]} : vector<8x384xf32> to vector<8x128xf32>
    %27 = arith.addf %26, %3 : vector<8x128xf32>
    %28 = arith.mulf %16, %27 : vector<8x128xf32>
    %29 = arith.addf %25, %28 : vector<8x128xf32>
    %30 = math.tanh %29 : vector<8x128xf32>
    %cst_8 = arith.constant 1.000000e+00 : f32
    %31 = vector.broadcast %cst_8 : f32 to vector<8x128xf32>
    %32 = arith.subf %31, %24 : vector<8x128xf32>
    %33 = arith.mulf %32, %30 : vector<8x128xf32>
    %34 = arith.mulf %24, %4 : vector<8x128xf32>
    %35 = arith.addf %33, %34 : vector<8x128xf32>
    %36 = arith.index_cast %c0_i32 : i32 to index
    %c0_9 = arith.constant 0 : index
    %c0_10 = arith.constant 0 : index
    %37 = vector.load %arg4[%36, %c0_9, %c0_10] : memref<8x8x128xf32, #tpu.memory_space<vmem>>, vector<1x8x128xf32>
    %38 = vector.shape_cast %37 : vector<1x8x128xf32> to vector<8x128xf32>
    %39 = vector.shape_cast %35 : vector<8x128xf32> to vector<1x8x128xf32>
    tpu.vector_store %arg4[%36, %c0_9, %c0_10], %39 {strides = array<i32>} : memref<8x8x128xf32, #tpu.memory_space<vmem>>, vector<1x8x128xf32>,
    %c1_i32 = arith.constant 1 : i32
    %40 = arith.index_cast %c1_i32 : i32 to index
    %c0_11 = arith.constant 0 : index
    %c0_12 = arith.constant 0 : index
    %41 = vector.load %arg1[%40, %c0_11, %c0_12] : memref<8x8x384xf32, #tpu.memory_space<vmem>>, vector<1x8x384xf32>
    %42 = vector.shape_cast %41 : vector<1x8x384xf32> to vector<8x384xf32>
    %cst_13 = arith.constant dense<0.000000e+00> : vector<8x384xf32>
    %43 = tpu.matmul %35, %0, %cst_13 {dimension_numbers = #tpu.dot_dimension_numbers<[1], [0], [0], [1], [0, 0, 1, 1], [], []>} : vector<8x128xf32>, vector<128x384xf32>, vector<8x384xf32> -> vector<8x384xf32>
    %44 = vector.extract_strided_slice %42 {offsets = [0, 0], sizes = [8, 128], strides = [1, 1]} : vector<8x384xf32> to vector<8x128xf32>
    %45 = vector.extract_strided_slice %43 {offsets = [0, 0], sizes = [8, 128], strides = [1, 1]} : vector<8x384xf32> to vector<8x128xf32>
    %46 = arith.addf %44, %45 : vector<8x128xf32>
    %47 = arith.negf %46 : vector<8x128xf32>
    %48 = math.exp %47 : vector<8x128xf32>
    %cst_14 = arith.constant 1.000000e+00 : f32
    %49 = vector.broadcast %cst_14 : f32 to vector<8x128xf32>
    %50 = arith.addf %49, %48 : vector<8x128xf32>
    %51 = arith.divf %49, %50 : vector<8x128xf32>
    %52 = vector.extract_strided_slice %42 {offsets = [0, 128], sizes = [8, 128], strides = [1, 1]} : vector<8x384xf32> to vector<8x128xf32>
    %53 = vector.extract_strided_slice %43 {offsets = [0, 128], sizes = [8, 128], strides = [1, 1]} : vector<8x384xf32> to vector<8x128xf32>
    %54 = arith.addf %52, %53 : vector<8x128xf32>
    %55 = arith.negf %54 : vector<8x128xf32>
    %56 = math.exp %55 : vector<8x128xf32>
    %cst_15 = arith.constant 1.000000e+00 : f32
    %57 = vector.broadcast %cst_15 : f32 to vector<8x128xf32>
    %58 = arith.addf %57, %56 : vector<8x128xf32>
    %59 = arith.divf %57, %58 : vector<8x128xf32>
    %60 = vector.extract_strided_slice %42 {offsets = [0, 256], sizes = [8, 128], strides = [1, 1]} : vector<8x384xf32> to vector<8x128xf32>
    %61 = vector.extract_strided_slice %43 {offsets = [0, 256], sizes = [8, 128], strides = [1, 1]} : vector<8x384xf32> to vector<8x128xf32>
    %62 = arith.addf %61, %3 : vector<8x128xf32>
    %63 = arith.mulf %51, %62 : vector<8x128xf32>
    %64 = arith.addf %60, %63 : vector<8x128xf32>
    %65 = math.tanh %64 : vector<8x128xf32>
    %cst_16 = arith.constant 1.000000e+00 : f32
    %66 = vector.broadcast %cst_16 : f32 to vector<8x128xf32>
    %67 = arith.subf %66, %59 : vector<8x128xf32>
    %68 = arith.mulf %67, %65 : vector<8x128xf32>
    %69 = arith.mulf %59, %35 : vector<8x128xf32>
    %70 = arith.addf %68, %69 : vector<8x128xf32>
    %71 = arith.index_cast %c1_i32 : i32 to index
    %c0_17 = arith.constant 0 : index
    %c0_18 = arith.constant 0 : index
    %72 = vector.load %arg4[%71, %c0_17, %c0_18] : memref<8x8x128xf32, #tpu.memory_space<vmem>>, vector<1x8x128xf32>
    %73 = vector.shape_cast %72 : vector<1x8x128xf32> to vector<8x128xf32>
    %74 = vector.shape_cast %70 : vector<8x128xf32> to vector<1x8x128xf32>
    tpu.vector_store %arg4[%71, %c0_17, %c0_18], %74 {strides = array<i32>} : memref<8x8x128xf32, #tpu.memory_space<vmem>>, vector<1x8x128xf32>,
    %c2_i32 = arith.constant 2 : i32
    %75 = arith.index_cast %c2_i32 : i32 to index
    %c0_19 = arith.constant 0 : index
    %c0_20 = arith.constant 0 : index
    %76 = vector.load %arg1[%75, %c0_19, %c0_20] : memref<8x8x384xf32, #tpu.memory_space<vmem>>, vector<1x8x384xf32>
    %77 = vector.shape_cast %76 : vector<1x8x384xf32> to vector<8x384xf32>
    %cst_21 = arith.constant dense<0.000000e+00> : vector<8x384xf32>
    %78 = tpu.matmul %70, %0, %cst_21 {dimension_numbers = #tpu.dot_dimension_numbers<[1], [0], [0], [1], [0, 0, 1, 1], [], []>} : vector<8x128xf32>, vector<128x384xf32>, vector<8x384xf32> -> vector<8x384xf32>
    %79 = vector.extract_strided_slice %77 {offsets = [0, 0], sizes = [8, 128], strides = [1, 1]} : vector<8x384xf32> to vector<8x128xf32>
    %80 = vector.extract_strided_slice %78 {offsets = [0, 0], sizes = [8, 128], strides = [1, 1]} : vector<8x384xf32> to vector<8x128xf32>
    %81 = arith.addf %79, %80 : vector<8x128xf32>
    %82 = arith.negf %81 : vector<8x128xf32>
    %83 = math.exp %82 : vector<8x128xf32>
    %cst_22 = arith.constant 1.000000e+00 : f32
    %84 = vector.broadcast %cst_22 : f32 to vector<8x128xf32>
    %85 = arith.addf %84, %83 : vector<8x128xf32>
    %86 = arith.divf %84, %85 : vector<8x128xf32>
    %87 = vector.extract_strided_slice %77 {offsets = [0, 128], sizes = [8, 128], strides = [1, 1]} : vector<8x384xf32> to vector<8x128xf32>
    %88 = vector.extract_strided_slice %78 {offsets = [0, 128], sizes = [8, 128], strides = [1, 1]} : vector<8x384xf32> to vector<8x128xf32>
    %89 = arith.addf %87, %88 : vector<8x128xf32>
    %90 = arith.negf %89 : vector<8x128xf32>
    %91 = math.exp %90 : vector<8x128xf32>
    %cst_23 = arith.constant 1.000000e+00 : f32
    %92 = vector.broadcast %cst_23 : f32 to vector<8x128xf32>
    %93 = arith.addf %92, %91 : vector<8x128xf32>
    %94 = arith.divf %92, %93 : vector<8x128xf32>
    %95 = vector.extract_strided_slice %77 {offsets = [0, 256], sizes = [8, 128], strides = [1, 1]} : vector<8x384xf32> to vector<8x128xf32>
    %96 = vector.extract_strided_slice %78 {offsets = [0, 256], sizes = [8, 128], strides = [1, 1]} : vector<8x384xf32> to vector<8x128xf32>
    %97 = arith.addf %96, %3 : vector<8x128xf32>
    %98 = arith.mulf %86, %97 : vector<8x128xf32>
    %99 = arith.addf %95, %98 : vector<8x128xf32>
    %100 = math.tanh %99 : vector<8x128xf32>
    %cst_24 = arith.constant 1.000000e+00 : f32
    %101 = vector.broadcast %cst_24 : f32 to vector<8x128xf32>
    %102 = arith.subf %101, %94 : vector<8x128xf32>
    %103 = arith.mulf %102, %100 : vector<8x128xf32>
    %104 = arith.mulf %94, %70 : vector<8x128xf32>
    %105 = arith.addf %103, %104 : vector<8x128xf32>
    %106 = arith.index_cast %c2_i32 : i32 to index
    %c0_25 = arith.constant 0 : index
    %c0_26 = arith.constant 0 : index
    %107 = vector.load %arg4[%106, %c0_25, %c0_26] : memref<8x8x128xf32, #tpu.memory_space<vmem>>, vector<1x8x128xf32>
    %108 = vector.shape_cast %107 : vector<1x8x128xf32> to vector<8x128xf32>
    %109 = vector.shape_cast %105 : vector<8x128xf32> to vector<1x8x128xf32>
    tpu.vector_store %arg4[%106, %c0_25, %c0_26], %109 {strides = array<i32>} : memref<8x8x128xf32, #tpu.memory_space<vmem>>, vector<1x8x128xf32>,
    %c3_i32 = arith.constant 3 : i32
    %110 = arith.index_cast %c3_i32 : i32 to index
    %c0_27 = arith.constant 0 : index
    %c0_28 = arith.constant 0 : index
    %111 = vector.load %arg1[%110, %c0_27, %c0_28] : memref<8x8x384xf32, #tpu.memory_space<vmem>>, vector<1x8x384xf32>
    %112 = vector.shape_cast %111 : vector<1x8x384xf32> to vector<8x384xf32>
    %cst_29 = arith.constant dense<0.000000e+00> : vector<8x384xf32>
    %113 = tpu.matmul %105, %0, %cst_29 {dimension_numbers = #tpu.dot_dimension_numbers<[1], [0], [0], [1], [0, 0, 1, 1], [], []>} : vector<8x128xf32>, vector<128x384xf32>, vector<8x384xf32> -> vector<8x384xf32>
    %114 = vector.extract_strided_slice %112 {offsets = [0, 0], sizes = [8, 128], strides = [1, 1]} : vector<8x384xf32> to vector<8x128xf32>
    %115 = vector.extract_strided_slice %113 {offsets = [0, 0], sizes = [8, 128], strides = [1, 1]} : vector<8x384xf32> to vector<8x128xf32>
    %116 = arith.addf %114, %115 : vector<8x128xf32>
    %117 = arith.negf %116 : vector<8x128xf32>
    %118 = math.exp %117 : vector<8x128xf32>
    %cst_30 = arith.constant 1.000000e+00 : f32
    %119 = vector.broadcast %cst_30 : f32 to vector<8x128xf32>
    %120 = arith.addf %119, %118 : vector<8x128xf32>
    %121 = arith.divf %119, %120 : vector<8x128xf32>
    %122 = vector.extract_strided_slice %112 {offsets = [0, 128], sizes = [8, 128], strides = [1, 1]} : vector<8x384xf32> to vector<8x128xf32>
    %123 = vector.extract_strided_slice %113 {offsets = [0, 128], sizes = [8, 128], strides = [1, 1]} : vector<8x384xf32> to vector<8x128xf32>
    %124 = arith.addf %122, %123 : vector<8x128xf32>
    %125 = arith.negf %124 : vector<8x128xf32>
    %126 = math.exp %125 : vector<8x128xf32>
    %cst_31 = arith.constant 1.000000e+00 : f32
    %127 = vector.broadcast %cst_31 : f32 to vector<8x128xf32>
    %128 = arith.addf %127, %126 : vector<8x128xf32>
    %129 = arith.divf %127, %128 : vector<8x128xf32>
    %130 = vector.extract_strided_slice %112 {offsets = [0, 256], sizes = [8, 128], strides = [1, 1]} : vector<8x384xf32> to vector<8x128xf32>
    %131 = vector.extract_strided_slice %113 {offsets = [0, 256], sizes = [8, 128], strides = [1, 1]} : vector<8x384xf32> to vector<8x128xf32>
    %132 = arith.addf %131, %3 : vector<8x128xf32>
    %133 = arith.mulf %121, %132 : vector<8x128xf32>
    %134 = arith.addf %130, %133 : vector<8x128xf32>
    %135 = math.tanh %134 : vector<8x128xf32>
    %cst_32 = arith.constant 1.000000e+00 : f32
    %136 = vector.broadcast %cst_32 : f32 to vector<8x128xf32>
    %137 = arith.subf %136, %129 : vector<8x128xf32>
    %138 = arith.mulf %137, %135 : vector<8x128xf32>
    %139 = arith.mulf %129, %105 : vector<8x128xf32>
    %140 = arith.addf %138, %139 : vector<8x128xf32>
    %141 = arith.index_cast %c3_i32 : i32 to index
    %c0_33 = arith.constant 0 : index
    %c0_34 = arith.constant 0 : index
    %142 = vector.load %arg4[%141, %c0_33, %c0_34] : memref<8x8x128xf32, #tpu.memory_space<vmem>>, vector<1x8x128xf32>
    %143 = vector.shape_cast %142 : vector<1x8x128xf32> to vector<8x128xf32>
    %144 = vector.shape_cast %140 : vector<8x128xf32> to vector<1x8x128xf32>
    tpu.vector_store %arg4[%141, %c0_33, %c0_34], %144 {strides = array<i32>} : memref<8x8x128xf32, #tpu.memory_space<vmem>>, vector<1x8x128xf32>,
    %c4_i32 = arith.constant 4 : i32
    %145 = arith.index_cast %c4_i32 : i32 to index
    %c0_35 = arith.constant 0 : index
    %c0_36 = arith.constant 0 : index
    %146 = vector.load %arg1[%145, %c0_35, %c0_36] : memref<8x8x384xf32, #tpu.memory_space<vmem>>, vector<1x8x384xf32>
    %147 = vector.shape_cast %146 : vector<1x8x384xf32> to vector<8x384xf32>
    %cst_37 = arith.constant dense<0.000000e+00> : vector<8x384xf32>
    %148 = tpu.matmul %140, %0, %cst_37 {dimension_numbers = #tpu.dot_dimension_numbers<[1], [0], [0], [1], [0, 0, 1, 1], [], []>} : vector<8x128xf32>, vector<128x384xf32>, vector<8x384xf32> -> vector<8x384xf32>
    %149 = vector.extract_strided_slice %147 {offsets = [0, 0], sizes = [8, 128], strides = [1, 1]} : vector<8x384xf32> to vector<8x128xf32>
    %150 = vector.extract_strided_slice %148 {offsets = [0, 0], sizes = [8, 128], strides = [1, 1]} : vector<8x384xf32> to vector<8x128xf32>
    %151 = arith.addf %149, %150 : vector<8x128xf32>
    %152 = arith.negf %151 : vector<8x128xf32>
    %153 = math.exp %152 : vector<8x128xf32>
    %cst_38 = arith.constant 1.000000e+00 : f32
    %154 = vector.broadcast %cst_38 : f32 to vector<8x128xf32>
    %155 = arith.addf %154, %153 : vector<8x128xf32>
    %156 = arith.divf %154, %155 : vector<8x128xf32>
    %157 = vector.extract_strided_slice %147 {offsets = [0, 128], sizes = [8, 128], strides = [1, 1]} : vector<8x384xf32> to vector<8x128xf32>
    %158 = vector.extract_strided_slice %148 {offsets = [0, 128], sizes = [8, 128], strides = [1, 1]} : vector<8x384xf32> to vector<8x128xf32>
    %159 = arith.addf %157, %158 : vector<8x128xf32>
    %160 = arith.negf %159 : vector<8x128xf32>
    %161 = math.exp %160 : vector<8x128xf32>
    %cst_39 = arith.constant 1.000000e+00 : f32
    %162 = vector.broadcast %cst_39 : f32 to vector<8x128xf32>
    %163 = arith.addf %162, %161 : vector<8x128xf32>
    %164 = arith.divf %162, %163 : vector<8x128xf32>
    %165 = vector.extract_strided_slice %147 {offsets = [0, 256], sizes = [8, 128], strides = [1, 1]} : vector<8x384xf32> to vector<8x128xf32>
    %166 = vector.extract_strided_slice %148 {offsets = [0, 256], sizes = [8, 128], strides = [1, 1]} : vector<8x384xf32> to vector<8x128xf32>
    %167 = arith.addf %166, %3 : vector<8x128xf32>
    %168 = arith.mulf %156, %167 : vector<8x128xf32>
    %169 = arith.addf %165, %168 : vector<8x128xf32>
    %170 = math.tanh %169 : vector<8x128xf32>
    %cst_40 = arith.constant 1.000000e+00 : f32
    %171 = vector.broadcast %cst_40 : f32 to vector<8x128xf32>
    %172 = arith.subf %171, %164 : vector<8x128xf32>
    %173 = arith.mulf %172, %170 : vector<8x128xf32>
    %174 = arith.mulf %164, %140 : vector<8x128xf32>
    %175 = arith.addf %173, %174 : vector<8x128xf32>
    %176 = arith.index_cast %c4_i32 : i32 to index
    %c0_41 = arith.constant 0 : index
    %c0_42 = arith.constant 0 : index
    %177 = vector.load %arg4[%176, %c0_41, %c0_42] : memref<8x8x128xf32, #tpu.memory_space<vmem>>, vector<1x8x128xf32>
    %178 = vector.shape_cast %177 : vector<1x8x128xf32> to vector<8x128xf32>
    %179 = vector.shape_cast %175 : vector<8x128xf32> to vector<1x8x128xf32>
    tpu.vector_store %arg4[%176, %c0_41, %c0_42], %179 {strides = array<i32>} : memref<8x8x128xf32, #tpu.memory_space<vmem>>, vector<1x8x128xf32>,
    %c5_i32 = arith.constant 5 : i32
    %180 = arith.index_cast %c5_i32 : i32 to index
    %c0_43 = arith.constant 0 : index
    %c0_44 = arith.constant 0 : index
    %181 = vector.load %arg1[%180, %c0_43, %c0_44] : memref<8x8x384xf32, #tpu.memory_space<vmem>>, vector<1x8x384xf32>
    %182 = vector.shape_cast %181 : vector<1x8x384xf32> to vector<8x384xf32>
    %cst_45 = arith.constant dense<0.000000e+00> : vector<8x384xf32>
    %183 = tpu.matmul %175, %0, %cst_45 {dimension_numbers = #tpu.dot_dimension_numbers<[1], [0], [0], [1], [0, 0, 1, 1], [], []>} : vector<8x128xf32>, vector<128x384xf32>, vector<8x384xf32> -> vector<8x384xf32>
    %184 = vector.extract_strided_slice %182 {offsets = [0, 0], sizes = [8, 128], strides = [1, 1]} : vector<8x384xf32> to vector<8x128xf32>
    %185 = vector.extract_strided_slice %183 {offsets = [0, 0], sizes = [8, 128], strides = [1, 1]} : vector<8x384xf32> to vector<8x128xf32>
    %186 = arith.addf %184, %185 : vector<8x128xf32>
    %187 = arith.negf %186 : vector<8x128xf32>
    %188 = math.exp %187 : vector<8x128xf32>
    %cst_46 = arith.constant 1.000000e+00 : f32
    %189 = vector.broadcast %cst_46 : f32 to vector<8x128xf32>
    %190 = arith.addf %189, %188 : vector<8x128xf32>
    %191 = arith.divf %189, %190 : vector<8x128xf32>
    %192 = vector.extract_strided_slice %182 {offsets = [0, 128], sizes = [8, 128], strides = [1, 1]} : vector<8x384xf32> to vector<8x128xf32>
    %193 = vector.extract_strided_slice %183 {offsets = [0, 128], sizes = [8, 128], strides = [1, 1]} : vector<8x384xf32> to vector<8x128xf32>
    %194 = arith.addf %192, %193 : vector<8x128xf32>
    %195 = arith.negf %194 : vector<8x128xf32>
    %196 = math.exp %195 : vector<8x128xf32>
    %cst_47 = arith.constant 1.000000e+00 : f32
    %197 = vector.broadcast %cst_47 : f32 to vector<8x128xf32>
    %198 = arith.addf %197, %196 : vector<8x128xf32>
    %199 = arith.divf %197, %198 : vector<8x128xf32>
    %200 = vector.extract_strided_slice %182 {offsets = [0, 256], sizes = [8, 128], strides = [1, 1]} : vector<8x384xf32> to vector<8x128xf32>
    %201 = vector.extract_strided_slice %183 {offsets = [0, 256], sizes = [8, 128], strides = [1, 1]} : vector<8x384xf32> to vector<8x128xf32>
    %202 = arith.addf %201, %3 : vector<8x128xf32>
    %203 = arith.mulf %191, %202 : vector<8x128xf32>
    %204 = arith.addf %200, %203 : vector<8x128xf32>
    %205 = math.tanh %204 : vector<8x128xf32>
    %cst_48 = arith.constant 1.000000e+00 : f32
    %206 = vector.broadcast %cst_48 : f32 to vector<8x128xf32>
    %207 = arith.subf %206, %199 : vector<8x128xf32>
    %208 = arith.mulf %207, %205 : vector<8x128xf32>
    %209 = arith.mulf %199, %175 : vector<8x128xf32>
    %210 = arith.addf %208, %209 : vector<8x128xf32>
    %211 = arith.index_cast %c5_i32 : i32 to index
    %c0_49 = arith.constant 0 : index
    %c0_50 = arith.constant 0 : index
    %212 = vector.load %arg4[%211, %c0_49, %c0_50] : memref<8x8x128xf32, #tpu.memory_space<vmem>>, vector<1x8x128xf32>
    %213 = vector.shape_cast %212 : vector<1x8x128xf32> to vector<8x128xf32>
    %214 = vector.shape_cast %210 : vector<8x128xf32> to vector<1x8x128xf32>
    tpu.vector_store %arg4[%211, %c0_49, %c0_50], %214 {strides = array<i32>} : memref<8x8x128xf32, #tpu.memory_space<vmem>>, vector<1x8x128xf32>,
    %c6_i32 = arith.constant 6 : i32
    %215 = arith.index_cast %c6_i32 : i32 to index
    %c0_51 = arith.constant 0 : index
    %c0_52 = arith.constant 0 : index
    %216 = vector.load %arg1[%215, %c0_51, %c0_52] : memref<8x8x384xf32, #tpu.memory_space<vmem>>, vector<1x8x384xf32>
    %217 = vector.shape_cast %216 : vector<1x8x384xf32> to vector<8x384xf32>
    %cst_53 = arith.constant dense<0.000000e+00> : vector<8x384xf32>
    %218 = tpu.matmul %210, %0, %cst_53 {dimension_numbers = #tpu.dot_dimension_numbers<[1], [0], [0], [1], [0, 0, 1, 1], [], []>} : vector<8x128xf32>, vector<128x384xf32>, vector<8x384xf32> -> vector<8x384xf32>
    %219 = vector.extract_strided_slice %217 {offsets = [0, 0], sizes = [8, 128], strides = [1, 1]} : vector<8x384xf32> to vector<8x128xf32>
    %220 = vector.extract_strided_slice %218 {offsets = [0, 0], sizes = [8, 128], strides = [1, 1]} : vector<8x384xf32> to vector<8x128xf32>
    %221 = arith.addf %219, %220 : vector<8x128xf32>
    %222 = arith.negf %221 : vector<8x128xf32>
    %223 = math.exp %222 : vector<8x128xf32>
    %cst_54 = arith.constant 1.000000e+00 : f32
    %224 = vector.broadcast %cst_54 : f32 to vector<8x128xf32>
    %225 = arith.addf %224, %223 : vector<8x128xf32>
    %226 = arith.divf %224, %225 : vector<8x128xf32>
    %227 = vector.extract_strided_slice %217 {offsets = [0, 128], sizes = [8, 128], strides = [1, 1]} : vector<8x384xf32> to vector<8x128xf32>
    %228 = vector.extract_strided_slice %218 {offsets = [0, 128], sizes = [8, 128], strides = [1, 1]} : vector<8x384xf32> to vector<8x128xf32>
    %229 = arith.addf %227, %228 : vector<8x128xf32>
    %230 = arith.negf %229 : vector<8x128xf32>
    %231 = math.exp %230 : vector<8x128xf32>
    %cst_55 = arith.constant 1.000000e+00 : f32
    %232 = vector.broadcast %cst_55 : f32 to vector<8x128xf32>
    %233 = arith.addf %232, %231 : vector<8x128xf32>
    %234 = arith.divf %232, %233 : vector<8x128xf32>
    %235 = vector.extract_strided_slice %217 {offsets = [0, 256], sizes = [8, 128], strides = [1, 1]} : vector<8x384xf32> to vector<8x128xf32>
    %236 = vector.extract_strided_slice %218 {offsets = [0, 256], sizes = [8, 128], strides = [1, 1]} : vector<8x384xf32> to vector<8x128xf32>
    %237 = arith.addf %236, %3 : vector<8x128xf32>
    %238 = arith.mulf %226, %237 : vector<8x128xf32>
    %239 = arith.addf %235, %238 : vector<8x128xf32>
    %240 = math.tanh %239 : vector<8x128xf32>
    %cst_56 = arith.constant 1.000000e+00 : f32
    %241 = vector.broadcast %cst_56 : f32 to vector<8x128xf32>
    %242 = arith.subf %241, %234 : vector<8x128xf32>
    %243 = arith.mulf %242, %240 : vector<8x128xf32>
    %244 = arith.mulf %234, %210 : vector<8x128xf32>
    %245 = arith.addf %243, %244 : vector<8x128xf32>
    %246 = arith.index_cast %c6_i32 : i32 to index
    %c0_57 = arith.constant 0 : index
    %c0_58 = arith.constant 0 : index
    %247 = vector.load %arg4[%246, %c0_57, %c0_58] : memref<8x8x128xf32, #tpu.memory_space<vmem>>, vector<1x8x128xf32>
    %248 = vector.shape_cast %247 : vector<1x8x128xf32> to vector<8x128xf32>
    %249 = vector.shape_cast %245 : vector<8x128xf32> to vector<1x8x128xf32>
    tpu.vector_store %arg4[%246, %c0_57, %c0_58], %249 {strides = array<i32>} : memref<8x8x128xf32, #tpu.memory_space<vmem>>, vector<1x8x128xf32>,
    %c7_i32 = arith.constant 7 : i32
    %250 = arith.index_cast %c7_i32 : i32 to index
    %c0_59 = arith.constant 0 : index
    %c0_60 = arith.constant 0 : index
    %251 = vector.load %arg1[%250, %c0_59, %c0_60] : memref<8x8x384xf32, #tpu.memory_space<vmem>>, vector<1x8x384xf32>
    %252 = vector.shape_cast %251 : vector<1x8x384xf32> to vector<8x384xf32>
    %cst_61 = arith.constant dense<0.000000e+00> : vector<8x384xf32>
    %253 = tpu.matmul %245, %0, %cst_61 {dimension_numbers = #tpu.dot_dimension_numbers<[1], [0], [0], [1], [0, 0, 1, 1], [], []>} : vector<8x128xf32>, vector<128x384xf32>, vector<8x384xf32> -> vector<8x384xf32>
    %254 = vector.extract_strided_slice %252 {offsets = [0, 0], sizes = [8, 128], strides = [1, 1]} : vector<8x384xf32> to vector<8x128xf32>
    %255 = vector.extract_strided_slice %253 {offsets = [0, 0], sizes = [8, 128], strides = [1, 1]} : vector<8x384xf32> to vector<8x128xf32>
    %256 = arith.addf %254, %255 : vector<8x128xf32>
    %257 = arith.negf %256 : vector<8x128xf32>
    %258 = math.exp %257 : vector<8x128xf32>
    %cst_62 = arith.constant 1.000000e+00 : f32
    %259 = vector.broadcast %cst_62 : f32 to vector<8x128xf32>
    %260 = arith.addf %259, %258 : vector<8x128xf32>
    %261 = arith.divf %259, %260 : vector<8x128xf32>
    %262 = vector.extract_strided_slice %252 {offsets = [0, 128], sizes = [8, 128], strides = [1, 1]} : vector<8x384xf32> to vector<8x128xf32>
    %263 = vector.extract_strided_slice %253 {offsets = [0, 128], sizes = [8, 128], strides = [1, 1]} : vector<8x384xf32> to vector<8x128xf32>
    %264 = arith.addf %262, %263 : vector<8x128xf32>
    %265 = arith.negf %264 : vector<8x128xf32>
    %266 = math.exp %265 : vector<8x128xf32>
    %cst_63 = arith.constant 1.000000e+00 : f32
    %267 = vector.broadcast %cst_63 : f32 to vector<8x128xf32>
    %268 = arith.addf %267, %266 : vector<8x128xf32>
    %269 = arith.divf %267, %268 : vector<8x128xf32>
    %270 = vector.extract_strided_slice %252 {offsets = [0, 256], sizes = [8, 128], strides = [1, 1]} : vector<8x384xf32> to vector<8x128xf32>
    %271 = vector.extract_strided_slice %253 {offsets = [0, 256], sizes = [8, 128], strides = [1, 1]} : vector<8x384xf32> to vector<8x128xf32>
    %272 = arith.addf %271, %3 : vector<8x128xf32>
    %273 = arith.mulf %261, %272 : vector<8x128xf32>
    %274 = arith.addf %270, %273 : vector<8x128xf32>
    %275 = math.tanh %274 : vector<8x128xf32>
    %cst_64 = arith.constant 1.000000e+00 : f32
    %276 = vector.broadcast %cst_64 : f32 to vector<8x128xf32>
    %277 = arith.subf %276, %269 : vector<8x128xf32>
    %278 = arith.mulf %277, %275 : vector<8x128xf32>
    %279 = arith.mulf %269, %245 : vector<8x128xf32>
    %280 = arith.addf %278, %279 : vector<8x128xf32>
    %281 = arith.index_cast %c7_i32 : i32 to index
    %c0_65 = arith.constant 0 : index
    %c0_66 = arith.constant 0 : index
    %282 = vector.load %arg4[%281, %c0_65, %c0_66] : memref<8x8x128xf32, #tpu.memory_space<vmem>>, vector<1x8x128xf32>
    %283 = vector.shape_cast %282 : vector<1x8x128xf32> to vector<8x128xf32>
    %284 = vector.shape_cast %280 : vector<8x128xf32> to vector<1x8x128xf32>
    tpu.vector_store %arg4[%281, %c0_65, %c0_66], %284 {strides = array<i32>} : memref<8x8x128xf32, #tpu.memory_space<vmem>>, vector<1x8x128xf32>,
    %c8_i32 = arith.constant 8 : i32
    return
  }
  func.func @transform_0(%arg0: i32) -> (i32, i32, i32) {
    %c0_i32 = arith.constant 0 : i32
    %c0_i32_0 = arith.constant 0 : i32
    %c0_i32_1 = arith.constant 0 : i32
    %c0_i32_2 = arith.constant 0 : i32
    return %c0_i32, %c0_i32_0, %c0_i32_1 : i32, i32, i32
  }
  func.func @transform_1(%arg0: i32) -> (i32, i32) {
    %c0_i32 = arith.constant 0 : i32
    %c0_i32_0 = arith.constant 0 : i32
    %c0_i32_1 = arith.constant 0 : i32
    return %c0_i32, %c0_i32_0 : i32, i32
  }
  func.func @transform_2(%arg0: i32) -> (i32, i32) {
    %c0_i32 = arith.constant 0 : i32
    %c0_i32_0 = arith.constant 0 : i32
    %c0_i32_1 = arith.constant 0 : i32
    return %c0_i32, %c0_i32_0 : i32, i32
  }
  func.func @transform_3(%arg0: i32) -> (i32, i32, i32) {
    %c0_i32 = arith.constant 0 : i32
    %c0_i32_0 = arith.constant 0 : i32
    %c0_i32_1 = arith.constant 0 : i32
    %c0_i32_2 = arith.constant 0 : i32
    return %c0_i32, %c0_i32_0, %c0_i32_1 : i32, i32, i32
  }
}

</mosaic_0001>

<llo_original>
// kernel: tpu_custom_call.1
$region0: #{tpu_custom_call.1}
  #allocation0 [shape = 'u32[]', space=smem, size = 0x4, offset = 0x4, fixed_abs, tag = 'smem constant byte address 0x4 - core index']
  #allocation1 [shape = 'u32[72,128]{1,0:T(1,128)}', space=vmem, size = 0x9000, scoped, tag = 'internal scratch']
  %s0 = inlined_call_operand.hbm [shape: f32[8,8,384], index: 0, kind: input, shape index: {}]
  %s1 = inlined_call_operand.hbm [shape: f32[128,384], index: 1, kind: input, shape index: {}]
  %s2 = inlined_call_operand.vmem [shape: f32[1,128], index: 2, kind: input, shape index: {}]
  %s3 = inlined_call_operand.hbm [shape: f32[8,8,128], index: 3, kind: output, shape index: {}]
  %s4 = sld [smem:[#allocation0]]
  $region30: #{tpu_custom_call.1} parent=0
    _
  %s6 = ssub.s32 1, %s4
  %s7 = scalar_select 0, %s6, %s4
  $region1: #{tpu_custom_call.1} parent=0
    #allocation2 [shape = 'u8[98304]{0}', space=vmem, size = 0x18000, scoped, tag = 'input window, operand 0, single buffered']
    #allocation3 [shape = 's32[1]{0}', space=sflag, size = 0x4, scoped, tag = 'scoped memory for tpu_custom_call.1']
    #allocation4 [shape = 's32[1]{0}', space=sflag, size = 0x4, scoped, tag = 'scoped memory for tpu_custom_call.1']
    #allocation5 [shape = 'u8[196608]{0}', space=vmem, size = 0x30000, scoped, tag = 'input window, operand 1, single buffered']
    #allocation6 [shape = 's32[1]{0}', space=sflag, size = 0x4, scoped, tag = 'scoped memory for tpu_custom_call.1']
    #allocation7 [shape = 'u8[32768]{0}', space=vmem, size = 0x8000, scoped, tag = 'output window, operand 0, single buffered']
    %8 = vsyncpa [#allocation3], 0
    %9 = vsyncpa [#allocation6], 0
    %10 = vsyncpa [#allocation4], 0
    // Predicated region
    $region2: #{tpu_custom_call.1} parent=1 // pred_check
      _
    $region3: #{tpu_custom_call.1} parent=1 // pred_check_branch
      %12 = sbr.rel (0) target = $region5
    $region4: #{tpu_custom_call.1} parent=1 // pred_region
      %14 = vsyncadd [#allocation3], 0
      %s15 = sshll.u32 %s0, 4
      %s16 = int_to_ptr.hbm [resolvable:$true] %s15
      %s17 = sshll.u32 [#allocation2], 4
      %s18 = int_to_ptr.vmem [resolvable:$true] %s17
      %23 = dma.hbm_to_vmem [thread:$0]  %s16, 3072, %s18, [#allocation3], 384, 384, 24
    $region5: #{tpu_custom_call.1} parent=1 // pred_fallthru
      _
    // Predicated region
    $region6: #{tpu_custom_call.1} parent=1 // pred_check
      _
    $region7: #{tpu_custom_call.1} parent=1 // pred_check_branch
      %25 = sbr.rel (0) target = $region9
    $region8: #{tpu_custom_call.1} parent=1 // pred_region
      %27 = vsyncadd [#allocation6], 0
      %s28 = sshll.u32 %s1, 4
      %s29 = int_to_ptr.hbm [resolvable:$true] %s28
      %s30 = sshll.u32 [#allocation5], 4
      %s31 = int_to_ptr.vmem [resolvable:$true] %s30
      %36 = dma.hbm_to_vmem [thread:$0]  %s29, 6144, %s31, [#allocation6], 384, 384, 24
    $region9: #{tpu_custom_call.1} parent=1 // pred_fallthru
      _
    // Predicated region
    $region10: #{tpu_custom_call.1} parent=1 // pred_check
      _
    $region11: #{tpu_custom_call.1} parent=1 // pred_check_branch
      %38 = sbr.rel (0) target = $region13
    $region12: #{tpu_custom_call.1} parent=1 // pred_region
      _
    $region13: #{tpu_custom_call.1} parent=1 // pred_fallthru
      _
    // Predicated region
    $region14: #{tpu_custom_call.1} parent=1 // pred_check
      _
    $region15: #{tpu_custom_call.1} parent=1 // pred_check_branch
      %40 = sbr.rel (0) target = $region17
    $region16: #{tpu_custom_call.1} parent=1 // pred_region
      %42 = dma.done [#allocation3], 3072
    $region17: #{tpu_custom_call.1} parent=1 // pred_fallthru
      _
    // Predicated region
    $region18: #{tpu_custom_call.1} parent=1 // pred_check
      _
    $region19: #{tpu_custom_call.1} parent=1 // pred_check_branch
      %44 = sbr.rel (0) target = $region21
    $region20: #{tpu_custom_call.1} parent=1 // pred_region
      %46 = dma.done [#allocation6], 6144
    $region21: #{tpu_custom_call.1} parent=1 // pred_fallthru
      _
    %v47 = vld [vmem:[#allocation5] sm:$0xff]
    %v48 = vld [vmem:[#allocation5 + $0x8] sm:$0xff]
    %v49 = vld [vmem:[#allocation5 + $0x10] sm:$0xff]
    %v50 = vld [vmem:[#allocation5 + $0x18] sm:$0xff]
    %v51 = vld [vmem:[#allocation5 + $0x20] sm:$0xff]
    %v52 = vld [vmem:[#allocation5 + $0x28] sm:$0xff]
    %v53 = vld [vmem:[#allocation5 + $0x30] sm:$0xff]
    %v54 = vld [vmem:[#allocation5 + $0x38] sm:$0xff]
    %v55 = vld [vmem:[#allocation5 + $0x40] sm:$0xff]
    %v56 = vld [vmem:[#allocation5 + $0x48] sm:$0xff]
    %v57 = vld [vmem:[#allocation5 + $0x50] sm:$0xff]
    %v58 = vld [vmem:[#allocation5 + $0x58] sm:$0xff]
    %v59 = vld [vmem:[#allocation5 + $0x60] sm:$0xff]
    %v60 = vld [vmem:[#allocation5 + $0x68] sm:$0xff]
    %v61 = vld [vmem:[#allocation5 + $0x70] sm:$0xff]
    %v62 = vld [vmem:[#allocation5 + $0x78] sm:$0xff]
    %v63 = vld [vmem:[#allocation5 + $0x80] sm:$0xff]
    %v64 = vld [vmem:[#allocation5 + $0x88] sm:$0xff]
    %v65 = vld [vmem:[#allocation5 + $0x90] sm:$0xff]
    %v66 = vld [vmem:[#allocation5 + $0x98] sm:$0xff]
    %v67 = vld [vmem:[#allocation5 + $0xa0] sm:$0xff]
    %v68 = vld [vmem:[#allocation5 + $0xa8] sm:$0xff]
    %v69 = vld [vmem:[#allocation5 + $0xb0] sm:$0xff]
    %v70 = vld [vmem:[#allocation5 + $0xb8] sm:$0xff]
    %v71 = vld [vmem:[#allocation5 + $0xc0] sm:$0xff]
    %v72 = vld [vmem:[#allocation5 + $0xc8] sm:$0xff]
    %v73 = vld [vmem:[#allocation5 + $0xd0] sm:$0xff]
    %v74 = vld [vmem:[#allocation5 + $0xd8] sm:$0xff]
    %v75 = vld [vmem:[#allocation5 + $0xe0] sm:$0xff]
    %v76 = vld [vmem:[#allocation5 + $0xe8] sm:$0xff]
    %v77 = vld [vmem:[#allocation5 + $0xf0] sm:$0xff]
    %v78 = vld [vmem:[#allocation5 + $0xf8] sm:$0xff]
    %v79 = vld [vmem:[#allocation5 + $0x100] sm:$0xff]
    %v80 = vld [vmem:[#allocation5 + $0x108] sm:$0xff]
    %v81 = vld [vmem:[#allocation5 + $0x110] sm:$0xff]
    %v82 = vld [vmem:[#allocation5 + $0x118] sm:$0xff]
    %v83 = vld [vmem:[#allocation5 + $0x120] sm:$0xff]
    %v84 = vld [vmem:[#allocation5 + $0x128] sm:$0xff]
    %v85 = vld [vmem:[#allocation5 + $0x130] sm:$0xff]
    %v86 = vld [vmem:[#allocation5 + $0x138] sm:$0xff]
    %v87 = vld [vmem:[#allocation5 + $0x140] sm:$0xff]
    %v88 = vld [vmem:[#allocation5 + $0x148] sm:$0xff]
    %v89 = vld [vmem:[#allocation5 + $0x150] sm:$0xff]
    %v90 = vld [vmem:[#allocation5 + $0x158] sm:$0xff]
    %v91 = vld [vmem:[#allocation5 + $0x160] sm:$0xff]
    %v92 = vld [vmem:[#allocation5 + $0x168] sm:$0xff]
    %v93 = vld [vmem:[#allocation5 + $0x170] sm:$0xff]
    %v94 = vld [vmem:[#allocation5 + $0x178] sm:$0xff]
    %v95 = vld [vmem:[%s2] sm:$0x1]
    %v97 = vperm.slane %v95, 0
    %v99 = vld [vmem:[#allocation2] sm:$0xff]
    %v100 = vld [vmem:[#allocation2 + $0x8] sm:$0xff]
    %v101 = vld [vmem:[#allocation2 + $0x10] sm:$0xff]
    %102 = vmatpush.msra.mxu0 %v92
    %103 = vmatpush.msra.mxu0 %v89
    %104 = vmatpush.msra.mxu0 %v86
    %105 = vmatpush.msra.mxu0 %v83
    %106 = vmatpush.msra.mxu0 %v80
    %107 = vmatpush.msra.mxu0 %v77
    %108 = vmatpush.msra.mxu0 %v74
    %109 = vmatpush.msra.mxu0 %v71
    %110 = vmatpush.msra.mxu0 %v68
    %111 = vmatpush.msra.mxu0 %v65
    %112 = vmatpush.msra.mxu0 %v62
    %113 = vmatpush.msra.mxu0 %v59
    %114 = vmatpush.msra.mxu0 %v56
    %115 = vmatpush.msra.mxu0 %v53
    %116 = vmatpush.msra.mxu0 %v50
    %117 = vmatpush.msra.mxu0 %v47
    %118 = vmatmul.f32.gmra.mxu0 0.0
    %v119 = vpop.f32.mrf.mxu0
    %v120 = vadd.f32 0.0, %v119
    %121 = vdwg.mxu0
    %122 = vmatpush.msra.mxu0 %v93
    %123 = vmatpush.msra.mxu0 %v90
    %124 = vmatpush.msra.mxu0 %v87
    %125 = vmatpush.msra.mxu0 %v84
    %126 = vmatpush.msra.mxu0 %v81
    %127 = vmatpush.msra.mxu0 %v78
    %128 = vmatpush.msra.mxu0 %v75
    %129 = vmatpush.msra.mxu0 %v72
    %130 = vmatpush.msra.mxu0 %v69
    %131 = vmatpush.msra.mxu0 %v66
    %132 = vmatpush.msra.mxu0 %v63
    %133 = vmatpush.msra.mxu0 %v60
    %134 = vmatpush.msra.mxu0 %v57
    %135 = vmatpush.msra.mxu0 %v54
    %136 = vmatpush.msra.mxu0 %v51
    %137 = vmatpush.msra.mxu0 %v48
    %138 = vmatmul.f32.gmra.mxu0 0.0
    %v139 = vpop.f32.mrf.mxu0
    %v140 = vadd.f32 0.0, %v139
    %141 = vdwg.mxu0
    %142 = vmatpush.msra.mxu0 %v94
    %143 = vmatpush.msra.mxu0 %v91
    %144 = vmatpush.msra.mxu0 %v88
    %145 = vmatpush.msra.mxu0 %v85
    %146 = vmatpush.msra.mxu0 %v82
    %147 = vmatpush.msra.mxu0 %v79
    %148 = vmatpush.msra.mxu0 %v76
    %149 = vmatpush.msra.mxu0 %v73
    %150 = vmatpush.msra.mxu0 %v70
    %151 = vmatpush.msra.mxu0 %v67
    %152 = vmatpush.msra.mxu0 %v64
    %153 = vmatpush.msra.mxu0 %v61
    %154 = vmatpush.msra.mxu0 %v58
    %155 = vmatpush.msra.mxu0 %v55
    %156 = vmatpush.msra.mxu0 %v52
    %157 = vmatpush.msra.mxu0 %v49
    %158 = vmatmul.f32.gmra.mxu0 0.0
    %v159 = vpop.f32.mrf.mxu0
    %v160 = vadd.f32 0.0, %v159
    %161 = vdwg.mxu0
    %v162 = vadd.f32 %v99, %v120
    %v163 = vxor.u32 %v162, 2147483648
    %v164 = vmul.f32 %v163, 1.442695
    %v165 = vpow.pop %v164
    %v166 = vadd.f32 %v165, 1.0
    %v167 = vrcp.pop %v166
    %v168 = vmul.f32 %v166, %v167
    %v169 = vsub.f32 1.0, %v168
    %v170 = vmul.f32 %v167, %v169
    %v171 = vadd.f32 %v167, %v170
    %vm172 = vweird.f32 %v166
    %vm173 = vweird.f32 %v167
    %vm174 = vmor %vm172, %vm173
    %v175 = vsel %vm174, %v167, %v171
    %v176 = vand.u32 2147483647, %v166
    %vm177 = vcmp.eq.f32.partialorder %v176, 8.507059e+37
    %v178 = vand.u32 %v166, 2147483648
    %v179 = vor.u32 1.1754944e-38, %v178
    %v180 = vsel %vm177, %v179, %v175
    %v181 = vmul.f32 1.0, %v180
    %v182 = vadd.f32 %v100, %v140
    %v183 = vxor.u32 %v182, 2147483648
    %v184 = vmul.f32 %v183, 1.442695
    %v185 = vpow.pop %v184
    %v186 = vadd.f32 %v185, 1.0
    %v187 = vrcp.pop %v186
    %v188 = vmul.f32 %v186, %v187
    %v189 = vsub.f32 1.0, %v188
    %v190 = vmul.f32 %v187, %v189
    %v191 = vadd.f32 %v187, %v190
    %vm192 = vweird.f32 %v186
    %vm193 = vweird.f32 %v187
    %vm194 = vmor %vm192, %vm193
    %v195 = vsel %vm194, %v187, %v191
    %v196 = vand.u32 2147483647, %v186
    %vm197 = vcmp.eq.f32.partialorder %v196, 8.507059e+37
    %v198 = vand.u32 %v186, 2147483648
    %v199 = vor.u32 1.1754944e-38, %v198
    %v200 = vsel %vm197, %v199, %v195
    %v201 = vmul.f32 1.0, %v200
    %v202 = vadd.f32 %v160, %v97
    %v203 = vmul.f32 %v181, %v202
    %v204 = vadd.f32 %v101, %v203
    %v205 = vtanh.pop %v204
    %v206 = vsub.f32 1.0, %v201
    %v207 = vmul.f32 %v206, %v205
    %v208 = vmul.f32 %v201, 0.0
    %v209 = vadd.f32 %v207, %v208
    %210 = vst [vmem:[#allocation7] sm:$0xff] %v209
    %s211 = scalar_lea.vmem [#allocation2], 24
    %v212 = vld [vmem:[%s211] sm:$0xff]
    %v213 = vld [vmem:[%s211 + $0x8] sm:$0xff]
    %v214 = vld [vmem:[%s211 + $0x10] sm:$0xff]
    %215 = vmatpush.msra.mxu0 %v92
    %216 = vmatpush.msra.mxu0 %v89
    %217 = vmatpush.msra.mxu0 %v86
    %218 = vmatpush.msra.mxu0 %v83
    %219 = vmatpush.msra.mxu0 %v80
    %220 = vmatpush.msra.mxu0 %v77
    %221 = vmatpush.msra.mxu0 %v74
    %222 = vmatpush.msra.mxu0 %v71
    %223 = vmatpush.msra.mxu0 %v68
    %224 = vmatpush.msra.mxu0 %v65
    %225 = vmatpush.msra.mxu0 %v62
    %226 = vmatpush.msra.mxu0 %v59
    %227 = vmatpush.msra.mxu0 %v56
    %228 = vmatpush.msra.mxu0 %v53
    %229 = vmatpush.msra.mxu0 %v50
    %230 = vmatpush.msra.mxu0 %v47
    %231 = vmatmul.f32.gmra.mxu0 %v209
    %v232 = vpop.f32.mrf.mxu0
    %v233 = vadd.f32 0.0, %v232
    %234 = vdwg.mxu0
    %235 = vmatpush.msra.mxu0 %v93
    %236 = vmatpush.msra.mxu0 %v90
    %237 = vmatpush.msra.mxu0 %v87
    %238 = vmatpush.msra.mxu0 %v84
    %239 = vmatpush.msra.mxu0 %v81
    %240 = vmatpush.msra.mxu0 %v78
    %241 = vmatpush.msra.mxu0 %v75
    %242 = vmatpush.msra.mxu0 %v72
    %243 = vmatpush.msra.mxu0 %v69
    %244 = vmatpush.msra.mxu0 %v66
    %245 = vmatpush.msra.mxu0 %v63
    %246 = vmatpush.msra.mxu0 %v60
    %247 = vmatpush.msra.mxu0 %v57
    %248 = vmatpush.msra.mxu0 %v54
    %249 = vmatpush.msra.mxu0 %v51
    %250 = vmatpush.msra.mxu0 %v48
    %251 = vmatmul.f32.gmra.mxu0 %v209
    %v252 = vpop.f32.mrf.mxu0
    %v253 = vadd.f32 0.0, %v252
    %254 = vdwg.mxu0
    %255 = vmatpush.msra.mxu0 %v94
    %256 = vmatpush.msra.mxu0 %v91
    %257 = vmatpush.msra.mxu0 %v88
    %258 = vmatpush.msra.mxu0 %v85
    %259 = vmatpush.msra.mxu0 %v82
    %260 = vmatpush.msra.mxu0 %v79
    %261 = vmatpush.msra.mxu0 %v76
    %262 = vmatpush.msra.mxu0 %v73
    %263 = vmatpush.msra.mxu0 %v70
    %264 = vmatpush.msra.mxu0 %v67
    %265 = vmatpush.msra.mxu0 %v64
    %266 = vmatpush.msra.mxu0 %v61
    %267 = vmatpush.msra.mxu0 %v58
    %268 = vmatpush.msra.mxu0 %v55
    %269 = vmatpush.msra.mxu0 %v52
    %270 = vmatpush.msra.mxu0 %v49
    %271 = vmatmul.f32.gmra.mxu0 %v209
    %v272 = vpop.f32.mrf.mxu0
    %v273 = vadd.f32 0.0, %v272
    %274 = vdwg.mxu0
    %v275 = vadd.f32 %v212, %v233
    %v276 = vxor.u32 %v275, 2147483648
    %v277 = vmul.f32 %v276, 1.442695
    %v278 = vpow.pop %v277
    %v279 = vadd.f32 %v278, 1.0
    %v280 = vrcp.pop %v279
    %v281 = vmul.f32 %v279, %v280
    %v282 = vsub.f32 1.0, %v281
    %v283 = vmul.f32 %v280, %v282
    %v284 = vadd.f32 %v280, %v283
    %vm285 = vweird.f32 %v279
    %vm286 = vweird.f32 %v280
    %vm287 = vmor %vm285, %vm286
    %v288 = vsel %vm287, %v280, %v284
    %v289 = vand.u32 2147483647, %v279
    %vm290 = vcmp.eq.f32.partialorder %v289, 8.507059e+37
    %v291 = vand.u32 %v279, 2147483648
    %v292 = vor.u32 1.1754944e-38, %v291
    %v293 = vsel %vm290, %v292, %v288
    %v294 = vmul.f32 1.0, %v293
    %v295 = vadd.f32 %v213, %v253
    %v296 = vxor.u32 %v295, 2147483648
    %v297 = vmul.f32 %v296, 1.442695
    %v298 = vpow.pop %v297
    %v299 = vadd.f32 %v298, 1.0
    %v300 = vrcp.pop %v299
    %v301 = vmul.f32 %v299, %v300
    %v302 = vsub.f32 1.0, %v301
    %v303 = vmul.f32 %v300, %v302
    %v304 = vadd.f32 %v300, %v303
    %vm305 = vweird.f32 %v299
    %vm306 = vweird.f32 %v300
    %vm307 = vmor %vm305, %vm306
    %v308 = vsel %vm307, %v300, %v304
    %v309 = vand.u32 2147483647, %v299
    %vm310 = vcmp.eq.f32.partialorder %v309, 8.507059e+37
    %v311 = vand.u32 %v299, 2147483648
    %v312 = vor.u32 1.1754944e-38, %v311
    %v313 = vsel %vm310, %v312, %v308
    %v314 = vmul.f32 1.0, %v313
    %v315 = vadd.f32 %v273, %v97
    %v316 = vmul.f32 %v294, %v315
    %v317 = vadd.f32 %v214, %v316
    %v318 = vtanh.pop %v317
    %v319 = vsub.f32 1.0, %v314
    %v320 = vmul.f32 %v319, %v318
    %v321 = vmul.f32 %v314, %v209
    %v322 = vadd.f32 %v320, %v321
    %s323 = scalar_lea.vmem [#allocation7], 8
    %324 = vst [vmem:[%s323] sm:$0xff] %v322
    %s325 = scalar_lea.vmem [#allocation2], 48
    %v326 = vld [vmem:[%s325] sm:$0xff]
    %v327 = vld [vmem:[%s325 + $0x8] sm:$0xff]
    %v328 = vld [vmem:[%s325 + $0x10] sm:$0xff]
    %329 = vmatpush.msra.mxu0 %v92
    %330 = vmatpush.msra.mxu0 %v89
    %331 = vmatpush.msra.mxu0 %v86
    %332 = vmatpush.msra.mxu0 %v83
    %333 = vmatpush.msra.mxu0 %v80
    %334 = vmatpush.msra.mxu0 %v77
    %335 = vmatpush.msra.mxu0 %v74
    %336 = vmatpush.msra.mxu0 %v71
    %337 = vmatpush.msra.mxu0 %v68
    %338 = vmatpush.msra.mxu0 %v65
    %339 = vmatpush.msra.mxu0 %v62
    %340 = vmatpush.msra.mxu0 %v59
    %341 = vmatpush.msra.mxu0 %v56
    %342 = vmatpush.msra.mxu0 %v53
    %343 = vmatpush.msra.mxu0 %v50
    %344 = vmatpush.msra.mxu0 %v47
    %345 = vmatmul.f32.gmra.mxu0 %v322
    %v346 = vpop.f32.mrf.mxu0
    %v347 = vadd.f32 0.0, %v346
    %348 = vdwg.mxu0
    %349 = vmatpush.msra.mxu0 %v93
    %350 = vmatpush.msra.mxu0 %v90
    %351 = vmatpush.msra.mxu0 %v87
    %352 = vmatpush.msra.mxu0 %v84
    %353 = vmatpush.msra.mxu0 %v81
    %354 = vmatpush.msra.mxu0 %v78
    %355 = vmatpush.msra.mxu0 %v75
    %356 = vmatpush.msra.mxu0 %v72
    %357 = vmatpush.msra.mxu0 %v69
    %358 = vmatpush.msra.mxu0 %v66
    %359 = vmatpush.msra.mxu0 %v63
    %360 = vmatpush.msra.mxu0 %v60
    %361 = vmatpush.msra.mxu0 %v57
    %362 = vmatpush.msra.mxu0 %v54
    %363 = vmatpush.msra.mxu0 %v51
    %364 = vmatpush.msra.mxu0 %v48
    %365 = vmatmul.f32.gmra.mxu0 %v322
    %v366 = vpop.f32.mrf.mxu0
    %v367 = vadd.f32 0.0, %v366
    %368 = vdwg.mxu0
    %369 = vmatpush.msra.mxu0 %v94
    %370 = vmatpush.msra.mxu0 %v91
    %371 = vmatpush.msra.mxu0 %v88
    %372 = vmatpush.msra.mxu0 %v85
    %373 = vmatpush.msra.mxu0 %v82
    %374 = vmatpush.msra.mxu0 %v79
    %375 = vmatpush.msra.mxu0 %v76
    %376 = vmatpush.msra.mxu0 %v73
    %377 = vmatpush.msra.mxu0 %v70
    %378 = vmatpush.msra.mxu0 %v67
    %379 = vmatpush.msra.mxu0 %v64
    %380 = vmatpush.msra.mxu0 %v61
    %381 = vmatpush.msra.mxu0 %v58
    %382 = vmatpush.msra.mxu0 %v55
    %383 = vmatpush.msra.mxu0 %v52
    %384 = vmatpush.msra.mxu0 %v49
    %385 = vmatmul.f32.gmra.mxu0 %v322
    %v386 = vpop.f32.mrf.mxu0
    %v387 = vadd.f32 0.0, %v386
    %388 = vdwg.mxu0
    %v389 = vadd.f32 %v326, %v347
    %v390 = vxor.u32 %v389, 2147483648
    %v391 = vmul.f32 %v390, 1.442695
    %v392 = vpow.pop %v391
    %v393 = vadd.f32 %v392, 1.0
    %v394 = vrcp.pop %v393
    %v395 = vmul.f32 %v393, %v394
    %v396 = vsub.f32 1.0, %v395
    %v397 = vmul.f32 %v394, %v396
    %v398 = vadd.f32 %v394, %v397
    %vm399 = vweird.f32 %v393
    %vm400 = vweird.f32 %v394
    %vm401 = vmor %vm399, %vm400
    %v402 = vsel %vm401, %v394, %v398
    %v403 = vand.u32 2147483647, %v393
    %vm404 = vcmp.eq.f32.partialorder %v403, 8.507059e+37
    %v405 = vand.u32 %v393, 2147483648
    %v406 = vor.u32 1.1754944e-38, %v405
    %v407 = vsel %vm404, %v406, %v402
    %v408 = vmul.f32 1.0, %v407
    %v409 = vadd.f32 %v327, %v367
    %v410 = vxor.u32 %v409, 2147483648
    %v411 = vmul.f32 %v410, 1.442695
    %v412 = vpow.pop %v411
    %v413 = vadd.f32 %v412, 1.0
    %v414 = vrcp.pop %v413
    %v415 = vmul.f32 %v413, %v414
    %v416 = vsub.f32 1.0, %v415
    %v417 = vmul.f32 %v414, %v416
    %v418 = vadd.f32 %v414, %v417
    %vm419 = vweird.f32 %v413
    %vm420 = vweird.f32 %v414
    %vm421 = vmor %vm419, %vm420
    %v422 = vsel %vm421, %v414, %v418
    %v423 = vand.u32 2147483647, %v413
    %vm424 = vcmp.eq.f32.partialorder %v423, 8.507059e+37
    %v425 = vand.u32 %v413, 2147483648
    %v426 = vor.u32 1.1754944e-38, %v425
    %v427 = vsel %vm424, %v426, %v422
    %v428 = vmul.f32 1.0, %v427
    %v429 = vadd.f32 %v387, %v97
    %v430 = vmul.f32 %v408, %v429
    %v431 = vadd.f32 %v328, %v430
    %v432 = vtanh.pop %v431
    %v433 = vsub.f32 1.0, %v428
    %v434 = vmul.f32 %v433, %v432
    %v435 = vmul.f32 %v428, %v322
    %v436 = vadd.f32 %v434, %v435
    %s437 = scalar_lea.vmem [#allocation7], 16
    %438 = vst [vmem:[%s437] sm:$0xff] %v436
    %s439 = scalar_lea.vmem [#allocation2], 72
    %v440 = vld [vmem:[%s439] sm:$0xff]
    %v441 = vld [vmem:[%s439 + $0x8] sm:$0xff]
    %v442 = vld [vmem:[%s439 + $0x10] sm:$0xff]
    %443 = vmatpush.msra.mxu0 %v92
    %444 = vmatpush.msra.mxu0 %v89
    %445 = vmatpush.msra.mxu0 %v86
    %446 = vmatpush.msra.mxu0 %v83
    %447 = vmatpush.msra.mxu0 %v80
    %448 = vmatpush.msra.mxu0 %v77
    %449 = vmatpush.msra.mxu0 %v74
    %450 = vmatpush.msra.mxu0 %v71
    %451 = vmatpush.msra.mxu0 %v68
    %452 = vmatpush.msra.mxu0 %v65
    %453 = vmatpush.msra.mxu0 %v62
    %454 = vmatpush.msra.mxu0 %v59
    %455 = vmatpush.msra.mxu0 %v56
    %456 = vmatpush.msra.mxu0 %v53
    %457 = vmatpush.msra.mxu0 %v50
    %458 = vmatpush.msra.mxu0 %v47
    %459 = vmatmul.f32.gmra.mxu0 %v436
    %v460 = vpop.f32.mrf.mxu0
    %v461 = vadd.f32 0.0, %v460
    %462 = vdwg.mxu0
    %463 = vmatpush.msra.mxu0 %v93
    %464 = vmatpush.msra.mxu0 %v90
    %465 = vmatpush.msra.mxu0 %v87
    %466 = vmatpush.msra.mxu0 %v84
    %467 = vmatpush.msra.mxu0 %v81
    %468 = vmatpush.msra.mxu0 %v78
    %469 = vmatpush.msra.mxu0 %v75
    %470 = vmatpush.msra.mxu0 %v72
    %471 = vmatpush.msra.mxu0 %v69
    %472 = vmatpush.msra.mxu0 %v66
    %473 = vmatpush.msra.mxu0 %v63
    %474 = vmatpush.msra.mxu0 %v60
    %475 = vmatpush.msra.mxu0 %v57
    %476 = vmatpush.msra.mxu0 %v54
    %477 = vmatpush.msra.mxu0 %v51
    %478 = vmatpush.msra.mxu0 %v48
    %479 = vmatmul.f32.gmra.mxu0 %v436
    %v480 = vpop.f32.mrf.mxu0
    %v481 = vadd.f32 0.0, %v480
    %482 = vdwg.mxu0
    %483 = vmatpush.msra.mxu0 %v94
    %484 = vmatpush.msra.mxu0 %v91
    %485 = vmatpush.msra.mxu0 %v88
    %486 = vmatpush.msra.mxu0 %v85
    %487 = vmatpush.msra.mxu0 %v82
    %488 = vmatpush.msra.mxu0 %v79
    %489 = vmatpush.msra.mxu0 %v76
    %490 = vmatpush.msra.mxu0 %v73
    %491 = vmatpush.msra.mxu0 %v70
    %492 = vmatpush.msra.mxu0 %v67
    %493 = vmatpush.msra.mxu0 %v64
    %494 = vmatpush.msra.mxu0 %v61
    %495 = vmatpush.msra.mxu0 %v58
    %496 = vmatpush.msra.mxu0 %v55
    %497 = vmatpush.msra.mxu0 %v52
    %498 = vmatpush.msra.mxu0 %v49
    %499 = vmatmul.f32.gmra.mxu0 %v436
    %v500 = vpop.f32.mrf.mxu0
    %v501 = vadd.f32 0.0, %v500
    %502 = vdwg.mxu0
    %v503 = vadd.f32 %v440, %v461
    %v504 = vxor.u32 %v503, 2147483648
    %v505 = vmul.f32 %v504, 1.442695
    %v506 = vpow.pop %v505
    %v507 = vadd.f32 %v506, 1.0
    %v508 = vrcp.pop %v507
    %v509 = vmul.f32 %v507, %v508
    %v510 = vsub.f32 1.0, %v509
    %v511 = vmul.f32 %v508, %v510
    %v512 = vadd.f32 %v508, %v511
    %vm513 = vweird.f32 %v507
    %vm514 = vweird.f32 %v508
    %vm515 = vmor %vm513, %vm514
    %v516 = vsel %vm515, %v508, %v512
    %v517 = vand.u32 2147483647, %v507
    %vm518 = vcmp.eq.f32.partialorder %v517, 8.507059e+37
    %v519 = vand.u32 %v507, 2147483648
    %v520 = vor.u32 1.1754944e-38, %v519
    %v521 = vsel %vm518, %v520, %v516
    %v522 = vmul.f32 1.0, %v521
    %v523 = vadd.f32 %v441, %v481
    %v524 = vxor.u32 %v523, 2147483648
    %v525 = vmul.f32 %v524, 1.442695
    %v526 = vpow.pop %v525
    %v527 = vadd.f32 %v526, 1.0
    %v528 = vrcp.pop %v527
    %v529 = vmul.f32 %v527, %v528
    %v530 = vsub.f32 1.0, %v529
    %v531 = vmul.f32 %v528, %v530
    %v532 = vadd.f32 %v528, %v531
    %vm533 = vweird.f32 %v527
    %vm534 = vweird.f32 %v528
    %vm535 = vmor %vm533, %vm534
    %v536 = vsel %vm535, %v528, %v532
    %v537 = vand.u32 2147483647, %v527
    %vm538 = vcmp.eq.f32.partialorder %v537, 8.507059e+37
    %v539 = vand.u32 %v527, 2147483648
    %v540 = vor.u32 1.1754944e-38, %v539
    %v541 = vsel %vm538, %v540, %v536
    %v542 = vmul.f32 1.0, %v541
    %v543 = vadd.f32 %v501, %v97
    %v544 = vmul.f32 %v522, %v543
    %v545 = vadd.f32 %v442, %v544
    %v546 = vtanh.pop %v545
    %v547 = vsub.f32 1.0, %v542
    %v548 = vmul.f32 %v547, %v546
    %v549 = vmul.f32 %v542, %v436
    %v550 = vadd.f32 %v548, %v549
    %s551 = scalar_lea.vmem [#allocation7], 24
    %552 = vst [vmem:[%s551] sm:$0xff] %v550
    %s553 = scalar_lea.vmem [#allocation2], 96
    %v554 = vld [vmem:[%s553] sm:$0xff]
    %v555 = vld [vmem:[%s553 + $0x8] sm:$0xff]
    %v556 = vld [vmem:[%s553 + $0x10] sm:$0xff]
    %557 = vmatpush.msra.mxu0 %v92
    %558 = vmatpush.msra.mxu0 %v89
    %559 = vmatpush.msra.mxu0 %v86
    %560 = vmatpush.msra.mxu0 %v83
    %561 = vmatpush.msra.mxu0 %v80
    %562 = vmatpush.msra.mxu0 %v77
    %563 = vmatpush.msra.mxu0 %v74
    %564 = vmatpush.msra.mxu0 %v71
    %565 = vmatpush.msra.mxu0 %v68
    %566 = vmatpush.msra.mxu0 %v65
    %567 = vmatpush.msra.mxu0 %v62
    %568 = vmatpush.msra.mxu0 %v59
    %569 = vmatpush.msra.mxu0 %v56
    %570 = vmatpush.msra.mxu0 %v53
    %571 = vmatpush.msra.mxu0 %v50
    %572 = vmatpush.msra.mxu0 %v47
    %573 = vmatmul.f32.gmra.mxu0 %v550
    %v574 = vpop.f32.mrf.mxu0
    %v575 = vadd.f32 0.0, %v574
    %576 = vdwg.mxu0
    %577 = vmatpush.msra.mxu0 %v93
    %578 = vmatpush.msra.mxu0 %v90
    %579 = vmatpush.msra.mxu0 %v87
    %580 = vmatpush.msra.mxu0 %v84
    %581 = vmatpush.msra.mxu0 %v81
    %582 = vmatpush.msra.mxu0 %v78
    %583 = vmatpush.msra.mxu0 %v75
    %584 = vmatpush.msra.mxu0 %v72
    %585 = vmatpush.msra.mxu0 %v69
    %586 = vmatpush.msra.mxu0 %v66
    %587 = vmatpush.msra.mxu0 %v63
    %588 = vmatpush.msra.mxu0 %v60
    %589 = vmatpush.msra.mxu0 %v57
    %590 = vmatpush.msra.mxu0 %v54
    %591 = vmatpush.msra.mxu0 %v51
    %592 = vmatpush.msra.mxu0 %v48
    %593 = vmatmul.f32.gmra.mxu0 %v550
    %v594 = vpop.f32.mrf.mxu0
    %v595 = vadd.f32 0.0, %v594
    %596 = vdwg.mxu0
    %597 = vmatpush.msra.mxu0 %v94
    %598 = vmatpush.msra.mxu0 %v91
    %599 = vmatpush.msra.mxu0 %v88
    %600 = vmatpush.msra.mxu0 %v85
    %601 = vmatpush.msra.mxu0 %v82
    %602 = vmatpush.msra.mxu0 %v79
    %603 = vmatpush.msra.mxu0 %v76
    %604 = vmatpush.msra.mxu0 %v73
    %605 = vmatpush.msra.mxu0 %v70
    %606 = vmatpush.msra.mxu0 %v67
    %607 = vmatpush.msra.mxu0 %v64
    %608 = vmatpush.msra.mxu0 %v61
    %609 = vmatpush.msra.mxu0 %v58
    %610 = vmatpush.msra.mxu0 %v55
    %611 = vmatpush.msra.mxu0 %v52
    %612 = vmatpush.msra.mxu0 %v49
    %613 = vmatmul.f32.gmra.mxu0 %v550
    %v614 = vpop.f32.mrf.mxu0
    %v615 = vadd.f32 0.0, %v614
    %616 = vdwg.mxu0
    %v617 = vadd.f32 %v554, %v575
    %v618 = vxor.u32 %v617, 2147483648
    %v619 = vmul.f32 %v618, 1.442695
    %v620 = vpow.pop %v619
    %v621 = vadd.f32 %v620, 1.0
    %v622 = vrcp.pop %v621
    %v623 = vmul.f32 %v621, %v622
    %v624 = vsub.f32 1.0, %v623
    %v625 = vmul.f32 %v622, %v624
    %v626 = vadd.f32 %v622, %v625
    %vm627 = vweird.f32 %v621
    %vm628 = vweird.f32 %v622
    %vm629 = vmor %vm627, %vm628
    %v630 = vsel %vm629, %v622, %v626
    %v631 = vand.u32 2147483647, %v621
    %vm632 = vcmp.eq.f32.partialorder %v631, 8.507059e+37
    %v633 = vand.u32 %v621, 2147483648
    %v634 = vor.u32 1.1754944e-38, %v633
    %v635 = vsel %vm632, %v634, %v630
    %v636 = vmul.f32 1.0, %v635
    %v637 = vadd.f32 %v555, %v595
    %v638 = vxor.u32 %v637, 2147483648
    %v639 = vmul.f32 %v638, 1.442695
    %v640 = vpow.pop %v639
    %v641 = vadd.f32 %v640, 1.0
    %v642 = vrcp.pop %v641
    %v643 = vmul.f32 %v641, %v642
    %v644 = vsub.f32 1.0, %v643
    %v645 = vmul.f32 %v642, %v644
    %v646 = vadd.f32 %v642, %v645
    %vm647 = vweird.f32 %v641
    %vm648 = vweird.f32 %v642
    %vm649 = vmor %vm647, %vm648
    %v650 = vsel %vm649, %v642, %v646
    %v651 = vand.u32 2147483647, %v641
    %vm652 = vcmp.eq.f32.partialorder %v651, 8.507059e+37
    %v653 = vand.u32 %v641, 2147483648
    %v654 = vor.u32 1.1754944e-38, %v653
    %v655 = vsel %vm652, %v654, %v650
    %v656 = vmul.f32 1.0, %v655
    %v657 = vadd.f32 %v615, %v97
    %v658 = vmul.f32 %v636, %v657
    %v659 = vadd.f32 %v556, %v658
    %v660 = vtanh.pop %v659
    %v661 = vsub.f32 1.0, %v656
    %v662 = vmul.f32 %v661, %v660
    %v663 = vmul.f32 %v656, %v550
    %v664 = vadd.f32 %v662, %v663
    %s665 = scalar_lea.vmem [#allocation7], 32
    %666 = vst [vmem:[%s665] sm:$0xff] %v664
    %s667 = scalar_lea.vmem [#allocation2], 120
    %v668 = vld [vmem:[%s667] sm:$0xff]
    %v669 = vld [vmem:[%s667 + $0x8] sm:$0xff]
    %v670 = vld [vmem:[%s667 + $0x10] sm:$0xff]
    %671 = vmatpush.msra.mxu0 %v92
    %672 = vmatpush.msra.mxu0 %v89
    %673 = vmatpush.msra.mxu0 %v86
    %674 = vmatpush.msra.mxu0 %v83
    %675 = vmatpush.msra.mxu0 %v80
    %676 = vmatpush.msra.mxu0 %v77
    %677 = vmatpush.msra.mxu0 %v74
    %678 = vmatpush.msra.mxu0 %v71
    %679 = vmatpush.msra.mxu0 %v68
    %680 = vmatpush.msra.mxu0 %v65
    %681 = vmatpush.msra.mxu0 %v62
    %682 = vmatpush.msra.mxu0 %v59
    %683 = vmatpush.msra.mxu0 %v56
    %684 = vmatpush.msra.mxu0 %v53
    %685 = vmatpush.msra.mxu0 %v50
    %686 = vmatpush.msra.mxu0 %v47
    %687 = vmatmul.f32.gmra.mxu0 %v664
    %v688 = vpop.f32.mrf.mxu0
    %v689 = vadd.f32 0.0, %v688
    %690 = vdwg.mxu0
    %691 = vmatpush.msra.mxu0 %v93
    %692 = vmatpush.msra.mxu0 %v90
    %693 = vmatpush.msra.mxu0 %v87
    %694 = vmatpush.msra.mxu0 %v84
    %695 = vmatpush.msra.mxu0 %v81
    %696 = vmatpush.msra.mxu0 %v78
    %697 = vmatpush.msra.mxu0 %v75
    %698 = vmatpush.msra.mxu0 %v72
    %699 = vmatpush.msra.mxu0 %v69
    %700 = vmatpush.msra.mxu0 %v66
    %701 = vmatpush.msra.mxu0 %v63
    %702 = vmatpush.msra.mxu0 %v60
    %703 = vmatpush.msra.mxu0 %v57
    %704 = vmatpush.msra.mxu0 %v54
    %705 = vmatpush.msra.mxu0 %v51
    %706 = vmatpush.msra.mxu0 %v48
    %707 = vmatmul.f32.gmra.mxu0 %v664
    %v708 = vpop.f32.mrf.mxu0
    %v709 = vadd.f32 0.0, %v708
    %710 = vdwg.mxu0
    %711 = vmatpush.msra.mxu0 %v94
    %712 = vmatpush.msra.mxu0 %v91
    %713 = vmatpush.msra.mxu0 %v88
    %714 = vmatpush.msra.mxu0 %v85
    %715 = vmatpush.msra.mxu0 %v82
    %716 = vmatpush.msra.mxu0 %v79
    %717 = vmatpush.msra.mxu0 %v76
    %718 = vmatpush.msra.mxu0 %v73
    %719 = vmatpush.msra.mxu0 %v70
    %720 = vmatpush.msra.mxu0 %v67
    %721 = vmatpush.msra.mxu0 %v64
    %722 = vmatpush.msra.mxu0 %v61
    %723 = vmatpush.msra.mxu0 %v58
    %724 = vmatpush.msra.mxu0 %v55
    %725 = vmatpush.msra.mxu0 %v52
    %726 = vmatpush.msra.mxu0 %v49
    %727 = vmatmul.f32.gmra.mxu0 %v664
    %v728 = vpop.f32.mrf.mxu0
    %v729 = vadd.f32 0.0, %v728
    %730 = vdwg.mxu0
    %v731 = vadd.f32 %v668, %v689
    %v732 = vxor.u32 %v731, 2147483648
    %v733 = vmul.f32 %v732, 1.442695
    %v734 = vpow.pop %v733
    %v735 = vadd.f32 %v734, 1.0
    %v736 = vrcp.pop %v735
    %v737 = vmul.f32 %v735, %v736
    %v738 = vsub.f32 1.0, %v737
    %v739 = vmul.f32 %v736, %v738
    %v740 = vadd.f32 %v736, %v739
    %vm741 = vweird.f32 %v735
    %vm742 = vweird.f32 %v736
    %vm743 = vmor %vm741, %vm742
    %v744 = vsel %vm743, %v736, %v740
    %v745 = vand.u32 2147483647, %v735
    %vm746 = vcmp.eq.f32.partialorder %v745, 8.507059e+37
    %v747 = vand.u32 %v735, 2147483648
    %v748 = vor.u32 1.1754944e-38, %v747
    %v749 = vsel %vm746, %v748, %v744
    %v750 = vmul.f32 1.0, %v749
    %v751 = vadd.f32 %v669, %v709
    %v752 = vxor.u32 %v751, 2147483648
    %v753 = vmul.f32 %v752, 1.442695
    %v754 = vpow.pop %v753
    %v755 = vadd.f32 %v754, 1.0
    %v756 = vrcp.pop %v755
    %v757 = vmul.f32 %v755, %v756
    %v758 = vsub.f32 1.0, %v757
    %v759 = vmul.f32 %v756, %v758
    %v760 = vadd.f32 %v756, %v759
    %vm761 = vweird.f32 %v755
    %vm762 = vweird.f32 %v756
    %vm763 = vmor %vm761, %vm762
    %v764 = vsel %vm763, %v756, %v760
    %v765 = vand.u32 2147483647, %v755
    %vm766 = vcmp.eq.f32.partialorder %v765, 8.507059e+37
    %v767 = vand.u32 %v755, 2147483648
    %v768 = vor.u32 1.1754944e-38, %v767
    %v769 = vsel %vm766, %v768, %v764
    %v770 = vmul.f32 1.0, %v769
    %v771 = vadd.f32 %v729, %v97
    %v772 = vmul.f32 %v750, %v771
    %v773 = vadd.f32 %v670, %v772
    %v774 = vtanh.pop %v773
    %v775 = vsub.f32 1.0, %v770
    %v776 = vmul.f32 %v775, %v774
    %v777 = vmul.f32 %v770, %v664
    %v778 = vadd.f32 %v776, %v777
    %s779 = scalar_lea.vmem [#allocation7], 40
    %780 = vst [vmem:[%s779] sm:$0xff] %v778
    %s781 = scalar_lea.vmem [#allocation2], 144
    %v782 = vld [vmem:[%s781] sm:$0xff]
    %v783 = vld [vmem:[%s781 + $0x8] sm:$0xff]
    %v784 = vld [vmem:[%s781 + $0x10] sm:$0xff]
    %785 = vmatpush.msra.mxu0 %v92
    %786 = vmatpush.msra.mxu0 %v89
    %787 = vmatpush.msra.mxu0 %v86
    %788 = vmatpush.msra.mxu0 %v83
    %789 = vmatpush.msra.mxu0 %v80
    %790 = vmatpush.msra.mxu0 %v77
    %791 = vmatpush.msra.mxu0 %v74
    %792 = vmatpush.msra.mxu0 %v71
    %793 = vmatpush.msra.mxu0 %v68
    %794 = vmatpush.msra.mxu0 %v65
    %795 = vmatpush.msra.mxu0 %v62
    %796 = vmatpush.msra.mxu0 %v59
    %797 = vmatpush.msra.mxu0 %v56
    %798 = vmatpush.msra.mxu0 %v53
    %799 = vmatpush.msra.mxu0 %v50
    %800 = vmatpush.msra.mxu0 %v47
    %801 = vmatmul.f32.gmra.mxu0 %v778
    %v802 = vpop.f32.mrf.mxu0
    %v803 = vadd.f32 0.0, %v802
    %804 = vdwg.mxu0
    %805 = vmatpush.msra.mxu0 %v93
    %806 = vmatpush.msra.mxu0 %v90
    %807 = vmatpush.msra.mxu0 %v87
    %808 = vmatpush.msra.mxu0 %v84
    %809 = vmatpush.msra.mxu0 %v81
    %810 = vmatpush.msra.mxu0 %v78
    %811 = vmatpush.msra.mxu0 %v75
    %812 = vmatpush.msra.mxu0 %v72
    %813 = vmatpush.msra.mxu0 %v69
    %814 = vmatpush.msra.mxu0 %v66
    %815 = vmatpush.msra.mxu0 %v63
    %816 = vmatpush.msra.mxu0 %v60
    %817 = vmatpush.msra.mxu0 %v57
    %818 = vmatpush.msra.mxu0 %v54
    %819 = vmatpush.msra.mxu0 %v51
    %820 = vmatpush.msra.mxu0 %v48
    %821 = vmatmul.f32.gmra.mxu0 %v778
    %v822 = vpop.f32.mrf.mxu0
    %v823 = vadd.f32 0.0, %v822
    %824 = vdwg.mxu0
    %825 = vmatpush.msra.mxu0 %v94
    %826 = vmatpush.msra.mxu0 %v91
    %827 = vmatpush.msra.mxu0 %v88
    %828 = vmatpush.msra.mxu0 %v85
    %829 = vmatpush.msra.mxu0 %v82
    %830 = vmatpush.msra.mxu0 %v79
    %831 = vmatpush.msra.mxu0 %v76
    %832 = vmatpush.msra.mxu0 %v73
    %833 = vmatpush.msra.mxu0 %v70
    %834 = vmatpush.msra.mxu0 %v67
    %835 = vmatpush.msra.mxu0 %v64
    %836 = vmatpush.msra.mxu0 %v61
    %837 = vmatpush.msra.mxu0 %v58
    %838 = vmatpush.msra.mxu0 %v55
    %839 = vmatpush.msra.mxu0 %v52
    %840 = vmatpush.msra.mxu0 %v49
    %841 = vmatmul.f32.gmra.mxu0 %v778
    %v842 = vpop.f32.mrf.mxu0
    %v843 = vadd.f32 0.0, %v842
    %844 = vdwg.mxu0
    %v845 = vadd.f32 %v782, %v803
    %v846 = vxor.u32 %v845, 2147483648
    %v847 = vmul.f32 %v846, 1.442695
    %v848 = vpow.pop %v847
    %v849 = vadd.f32 %v848, 1.0
    %v850 = vrcp.pop %v849
    %v851 = vmul.f32 %v849, %v850
    %v852 = vsub.f32 1.0, %v851
    %v853 = vmul.f32 %v850, %v852
    %v854 = vadd.f32 %v850, %v853
    %vm855 = vweird.f32 %v849
    %vm856 = vweird.f32 %v850
    %vm857 = vmor %vm855, %vm856
    %v858 = vsel %vm857, %v850, %v854
    %v859 = vand.u32 2147483647, %v849
    %vm860 = vcmp.eq.f32.partialorder %v859, 8.507059e+37
    %v861 = vand.u32 %v849, 2147483648
    %v862 = vor.u32 1.1754944e-38, %v861
    %v863 = vsel %vm860, %v862, %v858
    %v864 = vmul.f32 1.0, %v863
    %v865 = vadd.f32 %v783, %v823
    %v866 = vxor.u32 %v865, 2147483648
    %v867 = vmul.f32 %v866, 1.442695
    %v868 = vpow.pop %v867
    %v869 = vadd.f32 %v868, 1.0
    %v870 = vrcp.pop %v869
    %v871 = vmul.f32 %v869, %v870
    %v872 = vsub.f32 1.0, %v871
    %v873 = vmul.f32 %v870, %v872
    %v874 = vadd.f32 %v870, %v873
    %vm875 = vweird.f32 %v869
    %vm876 = vweird.f32 %v870
    %vm877 = vmor %vm875, %vm876
    %v878 = vsel %vm877, %v870, %v874
    %v879 = vand.u32 2147483647, %v869
    %vm880 = vcmp.eq.f32.partialorder %v879, 8.507059e+37
    %v881 = vand.u32 %v869, 2147483648
    %v882 = vor.u32 1.1754944e-38, %v881
    %v883 = vsel %vm880, %v882, %v878
    %v884 = vmul.f32 1.0, %v883
    %v885 = vadd.f32 %v843, %v97
    %v886 = vmul.f32 %v864, %v885
    %v887 = vadd.f32 %v784, %v886
    %v888 = vtanh.pop %v887
    %v889 = vsub.f32 1.0, %v884
    %v890 = vmul.f32 %v889, %v888
    %v891 = vmul.f32 %v884, %v778
    %v892 = vadd.f32 %v890, %v891
    %s893 = scalar_lea.vmem [#allocation7], 48
    %894 = vst [vmem:[%s893] sm:$0xff] %v892
    %s895 = scalar_lea.vmem [#allocation2], 168
    %v896 = vld [vmem:[%s895] sm:$0xff]
    %v897 = vld [vmem:[%s895 + $0x8] sm:$0xff]
    %v898 = vld [vmem:[%s895 + $0x10] sm:$0xff]
    %899 = vmatpush.msra.mxu0 %v92
    %900 = vmatpush.msra.mxu0 %v89
    %901 = vmatpush.msra.mxu0 %v86
    %902 = vmatpush.msra.mxu0 %v83
    %903 = vmatpush.msra.mxu0 %v80
    %904 = vmatpush.msra.mxu0 %v77
    %905 = vmatpush.msra.mxu0 %v74
    %906 = vmatpush.msra.mxu0 %v71
    %907 = vmatpush.msra.mxu0 %v68
    %908 = vmatpush.msra.mxu0 %v65
    %909 = vmatpush.msra.mxu0 %v62
    %910 = vmatpush.msra.mxu0 %v59
    %911 = vmatpush.msra.mxu0 %v56
    %912 = vmatpush.msra.mxu0 %v53
    %913 = vmatpush.msra.mxu0 %v50
    %914 = vmatpush.msra.mxu0 %v47
    %915 = vmatmul.f32.gmra.mxu0 %v892
    %v916 = vpop.f32.mrf.mxu0
    %v917 = vadd.f32 0.0, %v916
    %918 = vdwg.mxu0
    %919 = vmatpush.msra.mxu0 %v93
    %920 = vmatpush.msra.mxu0 %v90
    %921 = vmatpush.msra.mxu0 %v87
    %922 = vmatpush.msra.mxu0 %v84
    %923 = vmatpush.msra.mxu0 %v81
    %924 = vmatpush.msra.mxu0 %v78
    %925 = vmatpush.msra.mxu0 %v75
    %926 = vmatpush.msra.mxu0 %v72
    %927 = vmatpush.msra.mxu0 %v69
    %928 = vmatpush.msra.mxu0 %v66
    %929 = vmatpush.msra.mxu0 %v63
    %930 = vmatpush.msra.mxu0 %v60
    %931 = vmatpush.msra.mxu0 %v57
    %932 = vmatpush.msra.mxu0 %v54
    %933 = vmatpush.msra.mxu0 %v51
    %934 = vmatpush.msra.mxu0 %v48
    %935 = vmatmul.f32.gmra.mxu0 %v892
    %v936 = vpop.f32.mrf.mxu0
    %v937 = vadd.f32 0.0, %v936
    %938 = vdwg.mxu0
    %939 = vmatpush.msra.mxu0 %v94
    %940 = vmatpush.msra.mxu0 %v91
    %941 = vmatpush.msra.mxu0 %v88
    %942 = vmatpush.msra.mxu0 %v85
    %943 = vmatpush.msra.mxu0 %v82
    %944 = vmatpush.msra.mxu0 %v79
    %945 = vmatpush.msra.mxu0 %v76
    %946 = vmatpush.msra.mxu0 %v73
    %947 = vmatpush.msra.mxu0 %v70
    %948 = vmatpush.msra.mxu0 %v67
    %949 = vmatpush.msra.mxu0 %v64
    %950 = vmatpush.msra.mxu0 %v61
    %951 = vmatpush.msra.mxu0 %v58
    %952 = vmatpush.msra.mxu0 %v55
    %953 = vmatpush.msra.mxu0 %v52
    %954 = vmatpush.msra.mxu0 %v49
    %955 = vmatmul.f32.gmra.mxu0 %v892
    %v956 = vpop.f32.mrf.mxu0
    %v957 = vadd.f32 0.0, %v956
    %958 = vdwg.mxu0
    %v959 = vadd.f32 %v896, %v917
    %v960 = vxor.u32 %v959, 2147483648
    %v961 = vmul.f32 %v960, 1.442695
    %v962 = vpow.pop %v961
    %v963 = vadd.f32 %v962, 1.0
    %v964 = vrcp.pop %v963
    %v965 = vmul.f32 %v963, %v964
    %v966 = vsub.f32 1.0, %v965
    %v967 = vmul.f32 %v964, %v966
    %v968 = vadd.f32 %v964, %v967
    %vm969 = vweird.f32 %v963
    %vm970 = vweird.f32 %v964
    %vm971 = vmor %vm969, %vm970
    %v972 = vsel %vm971, %v964, %v968
    %v973 = vand.u32 2147483647, %v963
    %vm974 = vcmp.eq.f32.partialorder %v973, 8.507059e+37
    %v975 = vand.u32 %v963, 2147483648
    %v976 = vor.u32 1.1754944e-38, %v975
    %v977 = vsel %vm974, %v976, %v972
    %v978 = vmul.f32 1.0, %v977
    %v979 = vadd.f32 %v897, %v937
    %v980 = vxor.u32 %v979, 2147483648
    %v981 = vmul.f32 %v980, 1.442695
    %v982 = vpow.pop %v981
    %v983 = vadd.f32 %v982, 1.0
    %v984 = vrcp.pop %v983
    %v985 = vmul.f32 %v983, %v984
    %v986 = vsub.f32 1.0, %v985
    %v987 = vmul.f32 %v984, %v986
    %v988 = vadd.f32 %v984, %v987
    %vm989 = vweird.f32 %v983
    %vm990 = vweird.f32 %v984
    %vm991 = vmor %vm989, %vm990
    %v992 = vsel %vm991, %v984, %v988
    %v993 = vand.u32 2147483647, %v983
    %vm994 = vcmp.eq.f32.partialorder %v993, 8.507059e+37
    %v995 = vand.u32 %v983, 2147483648
    %v996 = vor.u32 1.1754944e-38, %v995
    %v997 = vsel %vm994, %v996, %v992
    %v998 = vmul.f32 1.0, %v997
    %v999 = vadd.f32 %v957, %v97
    %v1000 = vmul.f32 %v978, %v999
    %v1001 = vadd.f32 %v898, %v1000
    %v1002 = vtanh.pop %v1001
    %v1003 = vsub.f32 1.0, %v998
    %v1004 = vmul.f32 %v1003, %v1002
    %v1005 = vmul.f32 %v998, %v892
    %v1006 = vadd.f32 %v1004, %v1005
    %s1007 = scalar_lea.vmem [#allocation7], 56
    %1008 = vst [vmem:[%s1007] sm:$0xff] %v1006
    // Predicated region
    $region22: #{tpu_custom_call.1} parent=1 // pred_check
      _
    $region23: #{tpu_custom_call.1} parent=1 // pred_check_branch
      %1010 = sbr.rel (0) target = $region25
    $region24: #{tpu_custom_call.1} parent=1 // pred_region
      %1012 = vsyncadd [#allocation4], 0
      %s1013 = sshll.u32 [#allocation7], 4
      %s1014 = int_to_ptr.vmem [resolvable:$true] %s1013
      %s1015 = sshll.u32 %s3, 4
      %s1016 = int_to_ptr.hbm [resolvable:$true] %s1015
      %1021 = dma.vmem_to_hbm [thread:$0]  %s1014, 1024, %s1016, [#allocation4], 128, 128, 8
    $region25: #{tpu_custom_call.1} parent=1 // pred_fallthru
      _
    // Predicated region
    $region26: #{tpu_custom_call.1} parent=1 // pred_check
      _
    $region27: #{tpu_custom_call.1} parent=1 // pred_check_branch
      %1023 = sbr.rel (0) target = $region29
    $region28: #{tpu_custom_call.1} parent=1 // pred_region
      %1025 = dma.done [#allocation4], 1024
    $region29: #{tpu_custom_call.1} parent=1 // pred_fallthru
      _
    %1026 = vsyncpa [#allocation3], 1
    %1027 = vsyncpa [#allocation6], 1
    %1028 = vsyncpa [#allocation4], 1

</llo_original>
